<compile_context>
chip_gen: v6e
topology: v6e:2x2x1
jax: 0.10.0
libtpu: 0.0.40
codegen_flags: <defaults>
</compile_context>

<pallas_src>
import functools

import numpy as np
import jax
import jax.numpy as jnp
from jax.experimental import pallas as pl
from jax.experimental.pallas import tpu as pltpu


# --------------------------------------------------------------------------
# Small helpers
# --------------------------------------------------------------------------
def _round_up(x, m):
    return ((x + m - 1) // m) * m


def _vmem_capacity_bytes():
    try:
        info = pltpu.get_tpu_info()
        for attr in ("vmem_capacity_bytes", "vmem_size_bytes", "vmem_bytes"):
            v = getattr(info, attr, None)
            if v:
                return int(v)
    except Exception:
        pass
    return 64 * 1024 * 1024  # conservative default (v7x physical VMEM)


def _vmem_limit_bytes():
    # ~109 MiB on 128-MiB chips (v5e/v6e), ~54 MiB on 64-MiB chips (v7x).
    return int(min(_vmem_capacity_bytes() * 0.85, 110 * 1024 * 1024))


def _single_buffered(block_shape, index_map):
    """BlockSpec for constant-index operands (DMA'd once -> 1 buffer)."""
    try:
        return pl.BlockSpec(block_shape, index_map, pipeline_mode=pl.Buffered(1))
    except Exception:  # pipeline_mode not supported by this jax version
        return pl.BlockSpec(block_shape, index_map)


def _choose_tiles(N, tm_target, tk_target):
    """Pick (tm, tk, padded N) with 128-multiples and >= 2 row blocks."""
    n128 = _round_up(max(N, 1), 128)
    tm = max(128, (min(tm_target, n128) // 128) * 128)
    tk = max(128, (min(tk_target, n128) // 128) * 128)
    Np = _round_up(N, int(np.lcm(tm, tk)))
    # Keep >= 2 row blocks where possible so the "parallel" row axis can feed
    # both TensorCores on v7x (harmless on 1-TC v5e/v6e).
    if Np // tm < 2 and tm > 128:
        tm = max(128, ((Np // 2) // 128) * 128)
        Np = _round_up(N, int(np.lcm(tm, tk)))
    return tm, tk, Np


def _largest_divisor_tile(Np, target):
    """Largest multiple of 128 <= target that divides Np (Np % 128 == 0)."""
    t = max(128, (min(target, Np) // 128) * 128)
    while t > 128 and Np % t != 0:
        t -= 128
    return t


def _support_fits_vmem(Np, Fp, tm, tk, limit):
    need = (Np * Fp * 2          # resident support (bf16, single-buffered)
            + 2 * tm * tk * 2    # adj double buffers (bf16)
            + 2 * tm * Fp * 4    # output blocks (f32)
            + 4 * 1024 * 1024)   # headroom (bias, compiler scratch)
    return need <= limit


def _block_sparsity(adj_np, Np, tm, tk):
    """Host-side per-row-block nonzero column-block lists (static graph)."""
    n_rb, n_cb = Np // tm, Np // tk
    padded = np.zeros((Np, Np), dtype=bool)
    n = adj_np.shape[0]
    padded[:n, :n] = adj_np != 0
    nz = padded.reshape(n_rb, tm, n_cb, tk).any(axis=(1, 3))
    counts = nz.sum(axis=1).astype(np.int32)
    max_nnz = max(int(counts.max()) if counts.size else 0, 1)
    col_ids = np.zeros((n_rb, max_nnz), np.int32)
    for i in range(n_rb):
        cols = np.nonzero(nz[i])[0]
        if cols.size:
            col_ids[i, :cols.size] = cols
            # Pad with the last valid block id: index_map repeats the same
            # block index, so Pallas skips the DMA for padded steps.
            col_ids[i, cols.size:] = cols[-1]
    return counts, col_ids, nz


# --------------------------------------------------------------------------
# Kernel 1: support = x @ weight  (single K step, weight resident in VMEM)
# --------------------------------------------------------------------------
def _xw_kernel(x_ref, w_ref, o_ref):
    o_ref[...] = jnp.dot(
        x_ref[...], w_ref[...], preferred_element_type=jnp.float32
    ).astype(o_ref.dtype)


def _x_matmul_w(x_p, w_p, *, tm, vmem_limit):
    Mp, Kp = x_p.shape
    Kp2, Fp = w_p.shape
    assert Kp == Kp2 and Mp % tm == 0
    return pl.pallas_call(
        _xw_kernel,
        out_shape=jax.ShapeDtypeStruct((Mp, Fp), jnp.bfloat16),
        grid_spec=pltpu.PrefetchScalarGridSpec(
            num_scalar_prefetch=0,
            grid=(Mp // tm,),
            in_specs=[
                pl.BlockSpec((tm, Kp), lambda i: (i, 0)),
                # weight fully resident, DMA'd once -> single buffer
                _single_buffered((Kp, Fp), lambda i: (0, 0)),
            ],
            out_specs=pl.BlockSpec((tm, Fp), lambda i: (i, 0)),
        ),
        compiler_params=pltpu.CompilerParams(
            dimension_semantics=("parallel",),
            vmem_limit_bytes=vmem_limit,
        ),
    )(x_p, w_p)


# --------------------------------------------------------------------------
# Kernel 2a: dense  output = adj @ support + bias
# --------------------------------------------------------------------------
def _adj_dense_kernel(adj_ref, sup_ref, bias_ref, o_ref, *, tk,
                      support_resident):
    k = pl.program_id(1)

    @pl.when(k == 0)
    def _():
        o_ref[...] = jnp.zeros_like(o_ref)

    if support_resident:
        off = pl.multiple_of(k * tk, tk)
        sup_blk = sup_ref[pl.ds(off, tk), :]
    else:
        sup_blk = sup_ref[...]
    # Accumulate directly into the resident f32 output block (no scratch).
    o_ref[...] += jnp.dot(adj_ref[...], sup_blk,
                          preferred_element_type=jnp.float32)

    @pl.when(k == pl.num_programs(1) - 1)
    def _():
        o_ref[...] += bias_ref[...]


def _adj_spmm_dense(adj_p, support_p, bias_p, *, tm, tk, support_resident,
                    vmem_limit):
    Mp, Kp = adj_p.shape
    Kp2, Fp = support_p.shape
    assert Kp == Kp2 and Mp % tm == 0 and Kp % tk == 0
    if support_resident:
        sup_spec = _single_buffered((Kp, Fp), lambda i, k: (0, 0))
    else:
        sup_spec = pl.BlockSpec((tk, Fp), lambda i, k: (k, 0))
    kernel = functools.partial(_adj_dense_kernel, tk=tk,
                               support_resident=support_resident)
    return pl.pallas_call(
        kernel,
        out_shape=jax.ShapeDtypeStruct((Mp, Fp), jnp.float32),
        grid_spec=pltpu.PrefetchScalarGridSpec(
            num_scalar_prefetch=0,
            grid=(Mp // tm, Kp // tk),
            in_specs=[
                pl.BlockSpec((tm, tk), lambda i, k: (i, k)),
                sup_spec,
                _single_buffered((1, Fp), lambda i, k: (0, 0)),
            ],
            out_specs=pl.BlockSpec((tm, Fp), lambda i, k: (i, 0)),
        ),
        compiler_params=pltpu.CompilerParams(
            dimension_semantics=("parallel", "arbitrary"),
            vmem_limit_bytes=vmem_limit,
        ),
    )(adj_p, support_p, bias_p)


# --------------------------------------------------------------------------
# Kernel 2b: block-sparse  output = adj @ support + bias  (tile skipping)
# --------------------------------------------------------------------------
def _adj_sparse_kernel(cnt_ref, cid_ref, adj_ref, sup_ref, bias_ref, o_ref,
                       *, tk, support_resident):
    i = pl.program_id(0)          # output row block
    k = pl.program_id(1)          # position in this row block's nonzero list

    @pl.when(k == 0)
    def _():
        o_ref[...] = jnp.zeros_like(o_ref)

    # Only multiply real nonzero adj tiles; padded steps repeat the previous
    # block index (DMA skipped) and the MXU work is gated off here.
    @pl.when(k < cnt_ref[i])
    def _():
        if support_resident:
            cb = cid_ref[i, k]
            off = pl.multiple_of(cb * tk, tk)
            sup_blk = sup_ref[pl.ds(off, tk), :]
        else:
            sup_blk = sup_ref[...]
        o_ref[...] += jnp.dot(adj_ref[...], sup_blk,
                              preferred_element_type=jnp.float32)

    @pl.when(k == pl.num_programs(1) - 1)
    def _():
        o_ref[...] += bias_ref[...]


def _adj_spmm_sparse(adj_p, support_p, bias_p, counts, col_ids, *, tm, tk,
                     support_resident, vmem_limit):
    Mp, Kp = adj_p.shape
    Kp2, Fp = support_p.shape
    assert Kp == Kp2 and Mp % tm == 0 and Kp % tk == 0
    n_row_blocks, max_nnz = col_ids.shape
    assert n_row_blocks == Mp // tm
    if support_resident:
        sup_spec = _single_buffered((Kp, Fp), lambda i, k, cnt, cid: (0, 0))
    else:
        # v7x fallback: stream only the referenced support block per step.
        sup_spec = pl.BlockSpec((tk, Fp), lambda i, k, cnt, cid: (cid[i, k], 0))
    kernel = functools.partial(_adj_sparse_kernel, tk=tk,
                               support_resident=support_resident)
    return pl.pallas_call(
        kernel,
        out_shape=jax.ShapeDtypeStruct((Mp, Fp), jnp.float32),
        grid_spec=pltpu.PrefetchScalarGridSpec(
            num_scalar_prefetch=2,
            grid=(n_row_blocks, max_nnz),
            in_specs=[
                pl.BlockSpec((tm, tk), lambda i, k, cnt, cid: (i, cid[i, k])),
                sup_spec,
                _single_buffered((1, Fp), lambda i, k, cnt, cid: (0, 0)),
            ],
            out_specs=pl.BlockSpec((tm, Fp), lambda i, k, cnt, cid: (i, 0)),
        ),
        compiler_params=pltpu.CompilerParams(
            dimension_semantics=("parallel", "arbitrary"),
            vmem_limit_bytes=vmem_limit,
        ),
    )(counts, col_ids, adj_p, support_p, bias_p)


# --------------------------------------------------------------------------
# Host wrapper
# --------------------------------------------------------------------------
def graph_convolution(x, adj, weight, bias=None):
    """GraphConvolution forward:
         support = x @ weight
         output  = adj @ support
         return output + bias   (if bias is not None)
    """
    N, in_f = x.shape
    in_f2, out_f = weight.shape
    assert in_f == in_f2 and adj.shape == (N, N)

    limit = _vmem_limit_bytes()
    big_vmem = limit >= 80 * 1024 * 1024      # v5e/v6e-class VMEM

    # ---- Host-side graph-structure analysis (static graph). ----------------
    # TODO(synk): torch.sparse.mm uses COO storage; here the adjacency is
    # stored dense with tile-level skipping. For jit'd training loops this
    # metadata (and the padded bf16 adjacency) must be precomputed once
    # outside the traced region — adj must be a concrete array here.
    adj_np = np.asarray(adj)

    # Sparse-path tiling: wide row tiles for DMA size, narrow column tiles
    # (128) for sparsity capture.
    tm_s, tk_s, Np_s = _choose_tiles(N, 1024 if big_vmem else 512, 128)
    counts_np, col_ids_np, nz = _block_sparsity(adj_np, Np_s, tm_s, tk_s)
    empty_frac = 1.0 - float(nz.sum()) / max(nz.size, 1)
    use_sparse = empty_frac >= 0.15   # sparsity machinery must pay for itself

    if use_sparse:
        tm2, tk2, Np = tm_s, tk_s, Np_s
    else:
        tm2, tk2, Np = _choose_tiles(N, 1024 if big_vmem else 512,
                                     1024 if big_vmem else 512)

    in_fp = _round_up(in_f, 128)
    out_fp = _round_up(out_f, 128)
    # Kernel-1 row tile is decoupled from kernel-2's (x tile is only tm1 x
    # in_fp bf16, so big tiles amortize the per-step overhead for free).
    tm1 = _largest_divisor_tile(Np, 2048)

    # ---- Pad operands with zeros (exact math; result sliced back). ---------
    x_p = jnp.zeros((Np, in_fp), jnp.bfloat16).at[:N, :in_f].set(
        x.astype(jnp.bfloat16))
    w_p = jnp.zeros((in_fp, out_fp), jnp.bfloat16).at[:in_f, :out_f].set(
        weight.astype(jnp.bfloat16))
    adj_p = jnp.zeros((Np, Np), jnp.bfloat16).at[:N, :N].set(
        adj.astype(jnp.bfloat16))
    b = bias if bias is not None else jnp.zeros((out_f,), jnp.float32)
    bias_p = jnp.zeros((1, out_fp), jnp.float32).at[0, :out_f].set(
        b.astype(jnp.float32))

    # Kernel 1: bf16 support intermediate (halves its HBM round trip).
    support_p = _x_matmul_w(x_p, w_p, tm=tm1, vmem_limit=limit)

    # Resident support if it fits the per-generation VMEM budget, else stream.
    support_resident = _support_fits_vmem(Np, out_fp, tm2, tk2, limit)

    if use_sparse:
        out_p = _adj_spmm_sparse(
            adj_p, support_p, bias_p,
            jnp.asarray(counts_np), jnp.asarray(col_ids_np),
            tm=tm2, tk=tk2, support_resident=support_resident,
            vmem_limit=limit)
    else:
        out_p = _adj_spmm_dense(
            adj_p, support_p, bias_p,
            tm=tm2, tk=tk2, support_resident=support_resident,
            vmem_limit=limit)
    return out_p[:N, :out_f]


def init_graph_convolution_params(key, in_features, out_features, bias=True):
    # xavier_normal_: std = sqrt(2 / (fan_in + fan_out)); bias filled with 0.
    std = (2.0 / (in_features + out_features)) ** 0.5
    w = jax.random.normal(key, (in_features, out_features), jnp.float32) * std
    b = jnp.zeros((out_features,), jnp.float32) if bias else None
    return w, b


if __name__ == "__main__":
    key = jax.random.PRNGKey(0)
    k_w, k_x, k_adj, k_band = jax.random.split(key, 4)

    N, IN_F, OUT_F = 1024, 64, 96
    weight, bias = init_graph_convolution_params(k_w, IN_F, OUT_F, bias=True)
    x = jax.random.normal(k_x, (N, IN_F), jnp.float32)

    # ---- Test 1: unstructured ~10% density (no empty tiles -> dense path) --
    adj_raw = jax.random.uniform(k_adj, (N, N), jnp.float32)
    adj = jnp.where(adj_raw > 0.9, adj_raw, 0.0)
    adj = adj / jnp.maximum(adj.sum(axis=1, keepdims=True), 1e-6)

    out = jax.block_until_ready(graph_convolution(x, adj, weight, bias))
    ref = adj @ (x @ weight) + bias
    assert out.shape == (N, OUT_F)
    # bf16 operands + f32 MXU accumulation -> loosened tolerance vs f32 ref.
    assert jnp.allclose(out, ref, atol=3e-2, rtol=3e-2), float(
        jnp.max(jnp.abs(out - ref)))

    # ---- Test 2: banded adjacency (empty tiles -> block-sparse path) -------
    idx = jnp.arange(N)
    band = (jnp.abs(idx[:, None] - idx[None, :]) < 96).astype(jnp.float32)
    adj2 = jax.random.uniform(k_band, (N, N), jnp.float32) * band
    adj2 = adj2 / jnp.maximum(adj2.sum(axis=1, keepdims=True), 1e-6)

    out2 = jax.block_until_ready(graph_convolution(x, adj2, weight, bias))
    ref2 = adj2 @ (x @ weight) + bias
    assert out2.shape == (N, OUT_F)
    assert jnp.allclose(out2, ref2, atol=3e-2, rtol=3e-2), float(
        jnp.max(jnp.abs(out2 - ref2)))

    print("KERNEL_OK")
</pallas_src>

<mosaic_0001>
module attributes {stable_mosaic.version = 11 : i64} {
  func.func @_xw_kernel(%arg0: i32, %arg1: memref<1024x128xbf16, #tpu.memory_space<vmem>>, %arg2: memref<128x128xbf16, #tpu.memory_space<vmem>>, %arg3: memref<1024x128xbf16, #tpu.memory_space<vmem>>) attributes {dimension_semantics = [#tpu.dimension_semantics<parallel>], iteration_bounds = array<i64: 1>, scalar_prefetch = 0 : i64, scratch_operands = 0 : i64, tpu.core_type = #tpu.core_type<tc>, window_params = [{transform_indices = @transform_0, window_bounds = array<i64: 1024, 128>}, {pipeline_mode = #tpu.pipeline_mode<synchronous>, transform_indices = @transform_1, window_bounds = array<i64: 128, 128>}, {transform_indices = @transform_2, window_bounds = array<i64: 1024, 128>}]} {
    %c0 = arith.constant 0 : index
    %c0_0 = arith.constant 0 : index
    %0 = vector.load %arg1[%c0, %c0_0] : memref<1024x128xbf16, #tpu.memory_space<vmem>>, vector<1024x128xbf16>
    %c0_1 = arith.constant 0 : index
    %c0_2 = arith.constant 0 : index
    %1 = vector.load %arg2[%c0_1, %c0_2] : memref<128x128xbf16, #tpu.memory_space<vmem>>, vector<128x128xbf16>
    %cst = arith.constant dense<0.000000e+00> : vector<1024x128xf32>
    %2 = tpu.matmul %0, %1, %cst {dimension_numbers = #tpu.dot_dimension_numbers<[1], [0], [0], [1], [0, 0, 1, 1], [], []>} : vector<1024x128xbf16>, vector<128x128xbf16>, vector<1024x128xf32> -> vector<1024x128xf32>
    %3 = arith.truncf %2 : vector<1024x128xf32> to vector<1024x128xbf16>
    %c0_3 = arith.constant 0 : index
    %c0_4 = arith.constant 0 : index
    %4 = vector.load %arg3[%c0_3, %c0_4] : memref<1024x128xbf16, #tpu.memory_space<vmem>>, vector<1024x128xbf16>
    tpu.vector_store %arg3[%c0_3, %c0_4], %3 {strides = array<i32>} : memref<1024x128xbf16, #tpu.memory_space<vmem>>, vector<1024x128xbf16>,
    return
  }
  func.func @transform_0(%arg0: i32) -> (i32, i32) {
    %c0_i32 = arith.constant 0 : i32
    %c0_i32_0 = arith.constant 0 : i32
    return %arg0, %c0_i32 : i32, i32
  }
  func.func @transform_1(%arg0: i32) -> (i32, i32) {
    %c0_i32 = arith.constant 0 : i32
    %c0_i32_0 = arith.constant 0 : i32
    %c0_i32_1 = arith.constant 0 : i32
    return %c0_i32, %c0_i32_0 : i32, i32
  }
  func.func @transform_2(%arg0: i32) -> (i32, i32) {
    %c0_i32 = arith.constant 0 : i32
    %c0_i32_0 = arith.constant 0 : i32
    return %arg0, %c0_i32 : i32, i32
  }
}

</mosaic_0001>

<llo_original>
// kernel: tpu_custom_call.1
$region0: #{tpu_custom_call.1}
  #allocation0 [shape = 'u32[]', space=smem, size = 0x4, offset = 0x4, fixed_abs, tag = 'smem constant byte address 0x4 - core index']
  #allocation1 [shape = 'u32[144,128]{1,0:T(1,128)}', space=vmem, size = 0x12000, scoped, tag = 'internal scratch']
  %s0 = inlined_call_operand.hbm [shape: bf16[1024,128], index: 0, kind: input, shape index: {}]
  %s1 = inlined_call_operand.hbm [shape: bf16[128,128], index: 1, kind: input, shape index: {}]
  %s2 = inlined_call_operand.hbm [shape: bf16[1024,128], index: 2, kind: output, shape index: {}]
  %s3 = sld [smem:[#allocation0]]
  $region26: #{tpu_custom_call.1} parent=0
    _
  %s5 = ssub.s32 1, %s3
  %s6 = scalar_select 0, %s5, %s3
  $region1: #{tpu_custom_call.1} parent=0
    #allocation2 [shape = 'u8[262144]{0}', space=vmem, size = 0x40000, scoped, tag = 'input window, operand 0, single buffered']
    #allocation3 [shape = 's32[1]{0}', space=sflag, size = 0x4, scoped, tag = 'scoped memory for tpu_custom_call.1']
    #allocation4 [shape = 's32[1]{0}', space=sflag, size = 0x4, scoped, tag = 'scoped memory for tpu_custom_call.1']
    #allocation5 [shape = 'u8[32768]{0}', space=vmem, size = 0x8000, scoped, tag = 'input window, operand 1, single buffered']
    #allocation6 [shape = 's32[1]{0}', space=sflag, size = 0x4, scoped, tag = 'scoped memory for tpu_custom_call.1']
    #allocation7 [shape = 'u8[262144]{0}', space=vmem, size = 0x40000, scoped, tag = 'output window, operand 0, single buffered']
    %7 = vsyncpa [#allocation3], 0
    %8 = vsyncpa [#allocation6], 0
    %9 = vsyncpa [#allocation4], 0
    // Predicated region
    $region2: #{tpu_custom_call.1} parent=1 // pred_check
      _
    $region3: #{tpu_custom_call.1} parent=1 // pred_check_branch
      %11 = sbr.rel (0) target = $region5
    $region4: #{tpu_custom_call.1} parent=1 // pred_region
      %s13 = ssub.s32 8192, 8192
      %14 = vsyncadd [#allocation3], %s13
      %s15 = sshll.u32 [#allocation2], 4
      %s16 = int_to_ptr.vmem [resolvable:$true] %s15
      %21 = dma.hbm_to_vmem [thread:$0]  %s0, 8192, %s16, [#allocation3], 64, 64, 4
    $region5: #{tpu_custom_call.1} parent=1 // pred_fallthru
      _
    // Predicated region
    $region6: #{tpu_custom_call.1} parent=1 // pred_check
      _
    $region7: #{tpu_custom_call.1} parent=1 // pred_check_branch
      %23 = sbr.rel (0) target = $region9
    $region8: #{tpu_custom_call.1} parent=1 // pred_region
      %s25 = ssub.s32 1024, 1024
      %26 = vsyncadd [#allocation6], %s25
      %s27 = sshll.u32 [#allocation5], 4
      %s28 = int_to_ptr.vmem [resolvable:$true] %s27
      %33 = dma.hbm_to_vmem [thread:$0]  %s1, 1024, %s28, [#allocation6], 64, 64, 4
    $region9: #{tpu_custom_call.1} parent=1 // pred_fallthru
      _
    // Predicated region
    $region10: #{tpu_custom_call.1} parent=1 // pred_check
      _
    $region11: #{tpu_custom_call.1} parent=1 // pred_check_branch
      %35 = sbr.rel (0) target = $region13
    $region12: #{tpu_custom_call.1} parent=1 // pred_region
      %36 = dma.done [#allocation3], 8192
    $region13: #{tpu_custom_call.1} parent=1 // pred_fallthru
      _
    // Predicated region
    $region14: #{tpu_custom_call.1} parent=1 // pred_check
      _
    $region15: #{tpu_custom_call.1} parent=1 // pred_check_branch
      %38 = sbr.rel (0) target = $region17
    $region16: #{tpu_custom_call.1} parent=1 // pred_region
      %39 = dma.done [#allocation6], 1024
    $region17: #{tpu_custom_call.1} parent=1 // pred_fallthru
      _
    %v41 = vld [vmem:[#allocation2] sm:$0xf]
    %v42 = vld [vmem:[#allocation2 + $0x4] sm:$0xf]
    %v43 = vld [vmem:[#allocation2 + $0x8] sm:$0xf]
    %v44 = vld [vmem:[#allocation2 + $0xc] sm:$0xf]
    %v45 = vld [vmem:[#allocation2 + $0x10] sm:$0xf]
    %v46 = vld [vmem:[#allocation2 + $0x14] sm:$0xf]
    %v47 = vld [vmem:[#allocation2 + $0x18] sm:$0xf]
    %v48 = vld [vmem:[#allocation2 + $0x1c] sm:$0xf]
    %v49 = vld [vmem:[#allocation2 + $0x20] sm:$0xf]
    %v50 = vld [vmem:[#allocation2 + $0x24] sm:$0xf]
    %v51 = vld [vmem:[#allocation2 + $0x28] sm:$0xf]
    %v52 = vld [vmem:[#allocation2 + $0x2c] sm:$0xf]
    %v53 = vld [vmem:[#allocation2 + $0x30] sm:$0xf]
    %v54 = vld [vmem:[#allocation2 + $0x34] sm:$0xf]
    %v55 = vld [vmem:[#allocation2 + $0x38] sm:$0xf]
    %v56 = vld [vmem:[#allocation2 + $0x3c] sm:$0xf]
    %v57 = vld [vmem:[#allocation2 + $0x40] sm:$0xf]
    %v58 = vld [vmem:[#allocation2 + $0x44] sm:$0xf]
    %v59 = vld [vmem:[#allocation2 + $0x48] sm:$0xf]
    %v60 = vld [vmem:[#allocation2 + $0x4c] sm:$0xf]
    %v61 = vld [vmem:[#allocation2 + $0x50] sm:$0xf]
    %v62 = vld [vmem:[#allocation2 + $0x54] sm:$0xf]
    %v63 = vld [vmem:[#allocation2 + $0x58] sm:$0xf]
    %v64 = vld [vmem:[#allocation2 + $0x5c] sm:$0xf]
    %v65 = vld [vmem:[#allocation2 + $0x60] sm:$0xf]
    %v66 = vld [vmem:[#allocation2 + $0x64] sm:$0xf]
    %v67 = vld [vmem:[#allocation2 + $0x68] sm:$0xf]
    %v68 = vld [vmem:[#allocation2 + $0x6c] sm:$0xf]
    %v69 = vld [vmem:[#allocation2 + $0x70] sm:$0xf]
    %v70 = vld [vmem:[#allocation2 + $0x74] sm:$0xf]
    %v71 = vld [vmem:[#allocation2 + $0x78] sm:$0xf]
    %v72 = vld [vmem:[#allocation2 + $0x7c] sm:$0xf]
    %v73 = vld [vmem:[#allocation2 + $0x80] sm:$0xf]
    %v74 = vld [vmem:[#allocation2 + $0x84] sm:$0xf]
    %v75 = vld [vmem:[#allocation2 + $0x88] sm:$0xf]
    %v76 = vld [vmem:[#allocation2 + $0x8c] sm:$0xf]
    %v77 = vld [vmem:[#allocation2 + $0x90] sm:$0xf]
    %v78 = vld [vmem:[#allocation2 + $0x94] sm:$0xf]
    %v79 = vld [vmem:[#allocation2 + $0x98] sm:$0xf]
    %v80 = vld [vmem:[#allocation2 + $0x9c] sm:$0xf]
    %v81 = vld [vmem:[#allocation2 + $0xa0] sm:$0xf]
    %v82 = vld [vmem:[#allocation2 + $0xa4] sm:$0xf]
    %v83 = vld [vmem:[#allocation2 + $0xa8] sm:$0xf]
    %v84 = vld [vmem:[#allocation2 + $0xac] sm:$0xf]
    %v85 = vld [vmem:[#allocation2 + $0xb0] sm:$0xf]
    %v86 = vld [vmem:[#allocation2 + $0xb4] sm:$0xf]
    %v87 = vld [vmem:[#allocation2 + $0xb8] sm:$0xf]
    %v88 = vld [vmem:[#allocation2 + $0xbc] sm:$0xf]
    %v89 = vld [vmem:[#allocation2 + $0xc0] sm:$0xf]
    %v90 = vld [vmem:[#allocation2 + $0xc4] sm:$0xf]
    %v91 = vld [vmem:[#allocation2 + $0xc8] sm:$0xf]
    %v92 = vld [vmem:[#allocation2 + $0xcc] sm:$0xf]
    %v93 = vld [vmem:[#allocation2 + $0xd0] sm:$0xf]
    %v94 = vld [vmem:[#allocation2 + $0xd4] sm:$0xf]
    %v95 = vld [vmem:[#allocation2 + $0xd8] sm:$0xf]
    %v96 = vld [vmem:[#allocation2 + $0xdc] sm:$0xf]
    %v97 = vld [vmem:[#allocation2 + $0xe0] sm:$0xf]
    %v98 = vld [vmem:[#allocation2 + $0xe4] sm:$0xf]
    %v99 = vld [vmem:[#allocation2 + $0xe8] sm:$0xf]
    %v100 = vld [vmem:[#allocation2 + $0xec] sm:$0xf]
    %v101 = vld [vmem:[#allocation2 + $0xf0] sm:$0xf]
    %v102 = vld [vmem:[#allocation2 + $0xf4] sm:$0xf]
    %v103 = vld [vmem:[#allocation2 + $0xf8] sm:$0xf]
    %v104 = vld [vmem:[#allocation2 + $0xfc] sm:$0xf]
    %v105 = vld [vmem:[#allocation2 + $0x100] sm:$0xf]
    %v106 = vld [vmem:[#allocation2 + $0x104] sm:$0xf]
    %v107 = vld [vmem:[#allocation2 + $0x108] sm:$0xf]
    %v108 = vld [vmem:[#allocation2 + $0x10c] sm:$0xf]
    %v109 = vld [vmem:[#allocation2 + $0x110] sm:$0xf]
    %v110 = vld [vmem:[#allocation2 + $0x114] sm:$0xf]
    %v111 = vld [vmem:[#allocation2 + $0x118] sm:$0xf]
    %v112 = vld [vmem:[#allocation2 + $0x11c] sm:$0xf]
    %v113 = vld [vmem:[#allocation2 + $0x120] sm:$0xf]
    %v114 = vld [vmem:[#allocation2 + $0x124] sm:$0xf]
    %v115 = vld [vmem:[#allocation2 + $0x128] sm:$0xf]
    %v116 = vld [vmem:[#allocation2 + $0x12c] sm:$0xf]
    %v117 = vld [vmem:[#allocation2 + $0x130] sm:$0xf]
    %v118 = vld [vmem:[#allocation2 + $0x134] sm:$0xf]
    %v119 = vld [vmem:[#allocation2 + $0x138] sm:$0xf]
    %v120 = vld [vmem:[#allocation2 + $0x13c] sm:$0xf]
    %v121 = vld [vmem:[#allocation2 + $0x140] sm:$0xf]
    %v122 = vld [vmem:[#allocation2 + $0x144] sm:$0xf]
    %v123 = vld [vmem:[#allocation2 + $0x148] sm:$0xf]
    %v124 = vld [vmem:[#allocation2 + $0x14c] sm:$0xf]
    %v125 = vld [vmem:[#allocation2 + $0x150] sm:$0xf]
    %v126 = vld [vmem:[#allocation2 + $0x154] sm:$0xf]
    %v127 = vld [vmem:[#allocation2 + $0x158] sm:$0xf]
    %v128 = vld [vmem:[#allocation2 + $0x15c] sm:$0xf]
    %v129 = vld [vmem:[#allocation2 + $0x160] sm:$0xf]
    %v130 = vld [vmem:[#allocation2 + $0x164] sm:$0xf]
    %v131 = vld [vmem:[#allocation2 + $0x168] sm:$0xf]
    %v132 = vld [vmem:[#allocation2 + $0x16c] sm:$0xf]
    %v133 = vld [vmem:[#allocation2 + $0x170] sm:$0xf]
    %v134 = vld [vmem:[#allocation2 + $0x174] sm:$0xf]
    %v135 = vld [vmem:[#allocation2 + $0x178] sm:$0xf]
    %v136 = vld [vmem:[#allocation2 + $0x17c] sm:$0xf]
    %v137 = vld [vmem:[#allocation2 + $0x180] sm:$0xf]
    %v138 = vld [vmem:[#allocation2 + $0x184] sm:$0xf]
    %v139 = vld [vmem:[#allocation2 + $0x188] sm:$0xf]
    %v140 = vld [vmem:[#allocation2 + $0x18c] sm:$0xf]
    %v141 = vld [vmem:[#allocation2 + $0x190] sm:$0xf]
    %v142 = vld [vmem:[#allocation2 + $0x194] sm:$0xf]
    %v143 = vld [vmem:[#allocation2 + $0x198] sm:$0xf]
    %v144 = vld [vmem:[#allocation2 + $0x19c] sm:$0xf]
    %v145 = vld [vmem:[#allocation2 + $0x1a0] sm:$0xf]
    %v146 = vld [vmem:[#allocation2 + $0x1a4] sm:$0xf]
    %v147 = vld [vmem:[#allocation2 + $0x1a8] sm:$0xf]
    %v148 = vld [vmem:[#allocation2 + $0x1ac] sm:$0xf]
    %v149 = vld [vmem:[#allocation2 + $0x1b0] sm:$0xf]
    %v150 = vld [vmem:[#allocation2 + $0x1b4] sm:$0xf]
    %v151 = vld [vmem:[#allocation2 + $0x1b8] sm:$0xf]
    %v152 = vld [vmem:[#allocation2 + $0x1bc] sm:$0xf]
    %v153 = vld [vmem:[#allocation2 + $0x1c0] sm:$0xf]
    %v154 = vld [vmem:[#allocation2 + $0x1c4] sm:$0xf]
    %v155 = vld [vmem:[#allocation2 + $0x1c8] sm:$0xf]
    %v156 = vld [vmem:[#allocation2 + $0x1cc] sm:$0xf]
    %v157 = vld [vmem:[#allocation2 + $0x1d0] sm:$0xf]
    %v158 = vld [vmem:[#allocation2 + $0x1d4] sm:$0xf]
    %v159 = vld [vmem:[#allocation2 + $0x1d8] sm:$0xf]
    %v160 = vld [vmem:[#allocation2 + $0x1dc] sm:$0xf]
    %v161 = vld [vmem:[#allocation2 + $0x1e0] sm:$0xf]
    %v162 = vld [vmem:[#allocation2 + $0x1e4] sm:$0xf]
    %v163 = vld [vmem:[#allocation2 + $0x1e8] sm:$0xf]
    %v164 = vld [vmem:[#allocation2 + $0x1ec] sm:$0xf]
    %v165 = vld [vmem:[#allocation2 + $0x1f0] sm:$0xf]
    %v166 = vld [vmem:[#allocation2 + $0x1f4] sm:$0xf]
    %v167 = vld [vmem:[#allocation2 + $0x1f8] sm:$0xf]
    %v168 = vld [vmem:[#allocation2 + $0x1fc] sm:$0xf]
    %v169 = vld [vmem:[#allocation5] sm:$0xf]
    %v170 = vld [vmem:[#allocation5 + $0x4] sm:$0xf]
    %v171 = vld [vmem:[#allocation5 + $0x8] sm:$0xf]
    %v172 = vld [vmem:[#allocation5 + $0xc] sm:$0xf]
    %v173 = vld [vmem:[#allocation5 + $0x10] sm:$0xf]
    %v174 = vld [vmem:[#allocation5 + $0x14] sm:$0xf]
    %v175 = vld [vmem:[#allocation5 + $0x18] sm:$0xf]
    %v176 = vld [vmem:[#allocation5 + $0x1c] sm:$0xf]
    %v177 = vld [vmem:[#allocation5 + $0x20] sm:$0xf]
    %v178 = vld [vmem:[#allocation5 + $0x24] sm:$0xf]
    %v179 = vld [vmem:[#allocation5 + $0x28] sm:$0xf]
    %v180 = vld [vmem:[#allocation5 + $0x2c] sm:$0xf]
    %v181 = vld [vmem:[#allocation5 + $0x30] sm:$0xf]
    %v182 = vld [vmem:[#allocation5 + $0x34] sm:$0xf]
    %v183 = vld [vmem:[#allocation5 + $0x38] sm:$0xf]
    %v184 = vld [vmem:[#allocation5 + $0x3c] sm:$0xf]
    %v313 = vunpack.c.l.b16 %v41
    %v314 = vunpack.c.l.b16 %v42
    %v315 = vunpack.c.l.b16 %v43
    %v316 = vunpack.c.l.b16 %v44
    %v317 = vunpack.c.l.b16 %v45
    %v318 = vunpack.c.l.b16 %v46
    %v319 = vunpack.c.l.b16 %v47
    %v320 = vunpack.c.l.b16 %v48
    %v321 = vunpack.c.l.b16 %v49
    %v322 = vunpack.c.l.b16 %v50
    %v323 = vunpack.c.l.b16 %v51
    %v324 = vunpack.c.l.b16 %v52
    %v325 = vunpack.c.l.b16 %v53
    %v326 = vunpack.c.l.b16 %v54
    %v327 = vunpack.c.l.b16 %v55
    %v328 = vunpack.c.l.b16 %v56
    %v329 = vunpack.c.l.b16 %v57
    %v330 = vunpack.c.l.b16 %v58
    %v331 = vunpack.c.l.b16 %v59
    %v332 = vunpack.c.l.b16 %v60
    %v333 = vunpack.c.l.b16 %v61
    %v334 = vunpack.c.l.b16 %v62
    %v335 = vunpack.c.l.b16 %v63
    %v336 = vunpack.c.l.b16 %v64
    %v337 = vunpack.c.l.b16 %v65
    %v338 = vunpack.c.l.b16 %v66
    %v339 = vunpack.c.l.b16 %v67
    %v340 = vunpack.c.l.b16 %v68
    %v341 = vunpack.c.l.b16 %v69
    %v342 = vunpack.c.l.b16 %v70
    %v343 = vunpack.c.l.b16 %v71
    %v344 = vunpack.c.l.b16 %v72
    %v345 = vunpack.c.l.b16 %v73
    %v346 = vunpack.c.l.b16 %v74
    %v347 = vunpack.c.l.b16 %v75
    %v348 = vunpack.c.l.b16 %v76
    %v349 = vunpack.c.l.b16 %v77
    %v350 = vunpack.c.l.b16 %v78
    %v351 = vunpack.c.l.b16 %v79
    %v352 = vunpack.c.l.b16 %v80
    %v353 = vunpack.c.l.b16 %v81
    %v354 = vunpack.c.l.b16 %v82
    %v355 = vunpack.c.l.b16 %v83
    %v356 = vunpack.c.l.b16 %v84
    %v357 = vunpack.c.l.b16 %v85
    %v358 = vunpack.c.l.b16 %v86
    %v359 = vunpack.c.l.b16 %v87
    %v360 = vunpack.c.l.b16 %v88
    %v361 = vunpack.c.l.b16 %v89
    %v362 = vunpack.c.l.b16 %v90
    %v363 = vunpack.c.l.b16 %v91
    %v364 = vunpack.c.l.b16 %v92
    %v365 = vunpack.c.l.b16 %v93
    %v366 = vunpack.c.l.b16 %v94
    %v367 = vunpack.c.l.b16 %v95
    %v368 = vunpack.c.l.b16 %v96
    %v369 = vunpack.c.l.b16 %v97
    %v370 = vunpack.c.l.b16 %v98
    %v371 = vunpack.c.l.b16 %v99
    %v372 = vunpack.c.l.b16 %v100
    %v373 = vunpack.c.l.b16 %v101
    %v374 = vunpack.c.l.b16 %v102
    %v375 = vunpack.c.l.b16 %v103
    %v376 = vunpack.c.l.b16 %v104
    %v377 = vunpack.c.l.b16 %v105
    %v378 = vunpack.c.l.b16 %v106
    %v379 = vunpack.c.l.b16 %v107
    %v380 = vunpack.c.l.b16 %v108
    %v381 = vunpack.c.l.b16 %v109
    %v382 = vunpack.c.l.b16 %v110
    %v383 = vunpack.c.l.b16 %v111
    %v384 = vunpack.c.l.b16 %v112
    %v385 = vunpack.c.l.b16 %v113
    %v386 = vunpack.c.l.b16 %v114
    %v387 = vunpack.c.l.b16 %v115
    %v388 = vunpack.c.l.b16 %v116
    %v389 = vunpack.c.l.b16 %v117
    %v390 = vunpack.c.l.b16 %v118
    %v391 = vunpack.c.l.b16 %v119
    %v392 = vunpack.c.l.b16 %v120
    %v393 = vunpack.c.l.b16 %v121
    %v394 = vunpack.c.l.b16 %v122
    %v395 = vunpack.c.l.b16 %v123
    %v396 = vunpack.c.l.b16 %v124
    %v397 = vunpack.c.l.b16 %v125
    %v398 = vunpack.c.l.b16 %v126
    %v399 = vunpack.c.l.b16 %v127
    %v400 = vunpack.c.l.b16 %v128
    %v401 = vunpack.c.l.b16 %v129
    %v402 = vunpack.c.l.b16 %v130
    %v403 = vunpack.c.l.b16 %v131
    %v404 = vunpack.c.l.b16 %v132
    %v405 = vunpack.c.l.b16 %v133
    %v406 = vunpack.c.l.b16 %v134
    %v407 = vunpack.c.l.b16 %v135
    %v408 = vunpack.c.l.b16 %v136
    %v409 = vunpack.c.l.b16 %v137
    %v410 = vunpack.c.l.b16 %v138
    %v411 = vunpack.c.l.b16 %v139
    %v412 = vunpack.c.l.b16 %v140
    %v413 = vunpack.c.l.b16 %v141
    %v414 = vunpack.c.l.b16 %v142
    %v415 = vunpack.c.l.b16 %v143
    %v416 = vunpack.c.l.b16 %v144
    %v417 = vunpack.c.l.b16 %v145
    %v418 = vunpack.c.l.b16 %v146
    %v419 = vunpack.c.l.b16 %v147
    %v420 = vunpack.c.l.b16 %v148
    %v421 = vunpack.c.l.b16 %v149
    %v422 = vunpack.c.l.b16 %v150
    %v423 = vunpack.c.l.b16 %v151
    %v424 = vunpack.c.l.b16 %v152
    %v425 = vunpack.c.l.b16 %v153
    %v426 = vunpack.c.l.b16 %v154
    %v427 = vunpack.c.l.b16 %v155
    %v428 = vunpack.c.l.b16 %v156
    %v429 = vunpack.c.l.b16 %v157
    %v430 = vunpack.c.l.b16 %v158
    %v431 = vunpack.c.l.b16 %v159
    %v432 = vunpack.c.l.b16 %v160
    %v433 = vunpack.c.l.b16 %v161
    %v434 = vunpack.c.l.b16 %v162
    %v435 = vunpack.c.l.b16 %v163
    %v436 = vunpack.c.l.b16 %v164
    %v437 = vunpack.c.l.b16 %v165
    %v438 = vunpack.c.l.b16 %v166
    %v439 = vunpack.c.l.b16 %v167
    %v440 = vunpack.c.l.b16 %v168
    %v441 = vpack.c.b16 %v314, %v313
    %v442 = vpack.c.b16 %v316, %v315
    %v443 = vpack.c.b16 %v318, %v317
    %v444 = vpack.c.b16 %v320, %v319
    %v445 = vpack.c.b16 %v322, %v321
    %v446 = vpack.c.b16 %v324, %v323
    %v447 = vpack.c.b16 %v326, %v325
    %v448 = vpack.c.b16 %v328, %v327
    %v449 = vpack.c.b16 %v330, %v329
    %v450 = vpack.c.b16 %v332, %v331
    %v451 = vpack.c.b16 %v334, %v333
    %v452 = vpack.c.b16 %v336, %v335
    %v453 = vpack.c.b16 %v338, %v337
    %v454 = vpack.c.b16 %v340, %v339
    %v455 = vpack.c.b16 %v342, %v341
    %v456 = vpack.c.b16 %v344, %v343
    %v457 = vpack.c.b16 %v346, %v345
    %v458 = vpack.c.b16 %v348, %v347
    %v459 = vpack.c.b16 %v350, %v349
    %v460 = vpack.c.b16 %v352, %v351
    %v461 = vpack.c.b16 %v354, %v353
    %v462 = vpack.c.b16 %v356, %v355
    %v463 = vpack.c.b16 %v358, %v357
    %v464 = vpack.c.b16 %v360, %v359
    %v465 = vpack.c.b16 %v362, %v361
    %v466 = vpack.c.b16 %v364, %v363
    %v467 = vpack.c.b16 %v366, %v365
    %v468 = vpack.c.b16 %v368, %v367
    %v469 = vpack.c.b16 %v370, %v369
    %v470 = vpack.c.b16 %v372, %v371
    %v471 = vpack.c.b16 %v374, %v373
    %v472 = vpack.c.b16 %v376, %v375
    %v473 = vpack.c.b16 %v378, %v377
    %v474 = vpack.c.b16 %v380, %v379
    %v475 = vpack.c.b16 %v382, %v381
    %v476 = vpack.c.b16 %v384, %v383
    %v477 = vpack.c.b16 %v386, %v385
    %v478 = vpack.c.b16 %v388, %v387
    %v479 = vpack.c.b16 %v390, %v389
    %v480 = vpack.c.b16 %v392, %v391
    %v481 = vpack.c.b16 %v394, %v393
    %v482 = vpack.c.b16 %v396, %v395
    %v483 = vpack.c.b16 %v398, %v397
    %v484 = vpack.c.b16 %v400, %v399
    %v485 = vpack.c.b16 %v402, %v401
    %v486 = vpack.c.b16 %v404, %v403
    %v487 = vpack.c.b16 %v406, %v405
    %v488 = vpack.c.b16 %v408, %v407
    %v489 = vpack.c.b16 %v410, %v409
    %v490 = vpack.c.b16 %v412, %v411
    %v491 = vpack.c.b16 %v414, %v413
    %v492 = vpack.c.b16 %v416, %v415
    %v493 = vpack.c.b16 %v418, %v417
    %v494 = vpack.c.b16 %v420, %v419
    %v495 = vpack.c.b16 %v422, %v421
    %v496 = vpack.c.b16 %v424, %v423
    %v497 = vpack.c.b16 %v426, %v425
    %v498 = vpack.c.b16 %v428, %v427
    %v499 = vpack.c.b16 %v430, %v429
    %v500 = vpack.c.b16 %v432, %v431
    %v501 = vpack.c.b16 %v434, %v433
    %v502 = vpack.c.b16 %v436, %v435
    %v503 = vpack.c.b16 %v438, %v437
    %v504 = vpack.c.b16 %v440, %v439
    %v585 = vunpack.c.l.b16 %v169
    %v586 = vunpack.c.l.b16 %v170
    %v587 = vunpack.c.l.b16 %v171
    %v588 = vunpack.c.l.b16 %v172
    %v589 = vunpack.c.l.b16 %v173
    %v590 = vunpack.c.l.b16 %v174
    %v591 = vunpack.c.l.b16 %v175
    %v592 = vunpack.c.l.b16 %v176
    %v593 = vunpack.c.l.b16 %v177
    %v594 = vunpack.c.l.b16 %v178
    %v595 = vunpack.c.l.b16 %v179
    %v596 = vunpack.c.l.b16 %v180
    %v597 = vunpack.c.l.b16 %v181
    %v598 = vunpack.c.l.b16 %v182
    %v599 = vunpack.c.l.b16 %v183
    %v600 = vunpack.c.l.b16 %v184
    %v601 = vpack.c.b16 %v586, %v585
    %v602 = vpack.c.b16 %v588, %v587
    %v603 = vpack.c.b16 %v590, %v589
    %v604 = vpack.c.b16 %v592, %v591
    %v605 = vpack.c.b16 %v594, %v593
    %v606 = vpack.c.b16 %v596, %v595
    %v607 = vpack.c.b16 %v598, %v597
    %v608 = vpack.c.b16 %v600, %v599
    %617 = vmatprep.subr.bf16.mxu0 0
    %618 = vmatpush1.bf16.msra.mxu0 %v608
    %619 = vmatprep.subr.bf16.mxu0 0
    %620 = vmatpush1.bf16.msra.mxu0 %v607
    %621 = vmatprep.subr.bf16.mxu0 0
    %622 = vmatpush1.bf16.msra.mxu0 %v606
    %623 = vmatprep.subr.bf16.mxu0 0
    %624 = vmatpush1.bf16.msra.mxu0 %v605
    %625 = vmatprep.subr.bf16.mxu0 0
    %626 = vmatpush1.bf16.msra.mxu0 %v604
    %627 = vmatprep.subr.bf16.mxu0 0
    %628 = vmatpush1.bf16.msra.mxu0 %v603
    %629 = vmatprep.subr.bf16.mxu0 0
    %630 = vmatpush1.bf16.msra.mxu0 %v602
    %631 = vmatprep.subr.bf16.mxu0 0
    %632 = vmatpush1.bf16.msra.mxu0 %v601
    %633 = vmatprep.subr.bf16.mxu0 0
    %634 = vmatpush2.bf16.msra.mxu0 0
    %635 = vmatprep.subr.bf16.mxu0 0
    %636 = vmatpush2.bf16.msra.mxu0 0
    %637 = vmatprep.subr.bf16.mxu0 0
    %638 = vmatpush2.bf16.msra.mxu0 0
    %639 = vmatprep.subr.bf16.mxu0 0
    %640 = vmatpush2.bf16.msra.mxu0 0
    %641 = vmatprep.subr.bf16.mxu0 0
    %642 = vmatpush2.bf16.msra.mxu0 0
    %643 = vmatprep.subr.bf16.mxu0 0
    %644 = vmatpush2.bf16.msra.mxu0 0
    %645 = vmatprep.subr.bf16.mxu0 0
    %646 = vmatpush2.bf16.msra.mxu0 0
    %647 = vmatprep.subr.bf16.mxu0 0
    %648 = vmatpush2.bf16.msra.mxu0 0
    %649 = vmatprep.mubr.bf16.mxu0 0
    %650 = vmatmul.mubr.bf16.gmra.mxu0 %v441
    %v651 = vpop.f32.mrf.mxu0
    %v652 = vadd.f32 0.0, %v651
    %v653 = vpop.f32.mrf.mxu0
    %v654 = vpop.f32.mrf.mxu0
    %v655 = vadd.f32 0.0, %v654
    %v656 = vpop.f32.mrf.mxu0
    %657 = vmatprep.mubr.bf16.mxu0 0
    %658 = vmatmul.mubr.bf16.gmra.mxu0 %v442
    %v659 = vpop.f32.mrf.mxu0
    %v660 = vadd.f32 0.0, %v659
    %v661 = vpop.f32.mrf.mxu0
    %v662 = vpop.f32.mrf.mxu0
    %v663 = vadd.f32 0.0, %v662
    %v664 = vpop.f32.mrf.mxu0
    %665 = vmatprep.mubr.bf16.mxu0 0
    %666 = vmatmul.mubr.bf16.gmra.mxu0 %v443
    %v667 = vpop.f32.mrf.mxu0
    %v668 = vadd.f32 0.0, %v667
    %v669 = vpop.f32.mrf.mxu0
    %v670 = vpop.f32.mrf.mxu0
    %v671 = vadd.f32 0.0, %v670
    %v672 = vpop.f32.mrf.mxu0
    %673 = vmatprep.mubr.bf16.mxu0 0
    %674 = vmatmul.mubr.bf16.gmra.mxu0 %v444
    %v675 = vpop.f32.mrf.mxu0
    %v676 = vadd.f32 0.0, %v675
    %v677 = vpop.f32.mrf.mxu0
    %v678 = vpop.f32.mrf.mxu0
    %v679 = vadd.f32 0.0, %v678
    %v680 = vpop.f32.mrf.mxu0
    %681 = vmatprep.mubr.bf16.mxu0 0
    %682 = vmatmul.mubr.bf16.gmra.mxu0 %v445
    %v683 = vpop.f32.mrf.mxu0
    %v684 = vadd.f32 0.0, %v683
    %v685 = vpop.f32.mrf.mxu0
    %v686 = vpop.f32.mrf.mxu0
    %v687 = vadd.f32 0.0, %v686
    %v688 = vpop.f32.mrf.mxu0
    %689 = vmatprep.mubr.bf16.mxu0 0
    %690 = vmatmul.mubr.bf16.gmra.mxu0 %v446
    %v691 = vpop.f32.mrf.mxu0
    %v692 = vadd.f32 0.0, %v691
    %v693 = vpop.f32.mrf.mxu0
    %v694 = vpop.f32.mrf.mxu0
    %v695 = vadd.f32 0.0, %v694
    %v696 = vpop.f32.mrf.mxu0
    %697 = vmatprep.mubr.bf16.mxu0 0
    %698 = vmatmul.mubr.bf16.gmra.mxu0 %v447
    %v699 = vpop.f32.mrf.mxu0
    %v700 = vadd.f32 0.0, %v699
    %v701 = vpop.f32.mrf.mxu0
    %v702 = vpop.f32.mrf.mxu0
    %v703 = vadd.f32 0.0, %v702
    %v704 = vpop.f32.mrf.mxu0
    %705 = vmatprep.mubr.bf16.mxu0 0
    %706 = vmatmul.mubr.bf16.gmra.mxu0 %v448
    %v707 = vpop.f32.mrf.mxu0
    %v708 = vadd.f32 0.0, %v707
    %v709 = vpop.f32.mrf.mxu0
    %v710 = vpop.f32.mrf.mxu0
    %v711 = vadd.f32 0.0, %v710
    %v712 = vpop.f32.mrf.mxu0
    %713 = vmatprep.mubr.bf16.mxu0 0
    %714 = vmatmul.mubr.bf16.gmra.mxu0 %v449
    %v715 = vpop.f32.mrf.mxu0
    %v716 = vadd.f32 0.0, %v715
    %v717 = vpop.f32.mrf.mxu0
    %v718 = vpop.f32.mrf.mxu0
    %v719 = vadd.f32 0.0, %v718
    %v720 = vpop.f32.mrf.mxu0
    %721 = vmatprep.mubr.bf16.mxu0 0
    %722 = vmatmul.mubr.bf16.gmra.mxu0 %v450
    %v723 = vpop.f32.mrf.mxu0
    %v724 = vadd.f32 0.0, %v723
    %v725 = vpop.f32.mrf.mxu0
    %v726 = vpop.f32.mrf.mxu0
    %v727 = vadd.f32 0.0, %v726
    %v728 = vpop.f32.mrf.mxu0
    %729 = vmatprep.mubr.bf16.mxu0 0
    %730 = vmatmul.mubr.bf16.gmra.mxu0 %v451
    %v731 = vpop.f32.mrf.mxu0
    %v732 = vadd.f32 0.0, %v731
    %v733 = vpop.f32.mrf.mxu0
    %v734 = vpop.f32.mrf.mxu0
    %v735 = vadd.f32 0.0, %v734
    %v736 = vpop.f32.mrf.mxu0
    %737 = vmatprep.mubr.bf16.mxu0 0
    %738 = vmatmul.mubr.bf16.gmra.mxu0 %v452
    %v739 = vpop.f32.mrf.mxu0
    %v740 = vadd.f32 0.0, %v739
    %v741 = vpop.f32.mrf.mxu0
    %v742 = vpop.f32.mrf.mxu0
    %v743 = vadd.f32 0.0, %v742
    %v744 = vpop.f32.mrf.mxu0
    %745 = vmatprep.mubr.bf16.mxu0 0
    %746 = vmatmul.mubr.bf16.gmra.mxu0 %v453
    %v747 = vpop.f32.mrf.mxu0
    %v748 = vadd.f32 0.0, %v747
    %v749 = vpop.f32.mrf.mxu0
    %v750 = vpop.f32.mrf.mxu0
    %v751 = vadd.f32 0.0, %v750
    %v752 = vpop.f32.mrf.mxu0
    %753 = vmatprep.mubr.bf16.mxu0 0
    %754 = vmatmul.mubr.bf16.gmra.mxu0 %v454
    %v755 = vpop.f32.mrf.mxu0
    %v756 = vadd.f32 0.0, %v755
    %v757 = vpop.f32.mrf.mxu0
    %v758 = vpop.f32.mrf.mxu0
    %v759 = vadd.f32 0.0, %v758
    %v760 = vpop.f32.mrf.mxu0
    %761 = vmatprep.mubr.bf16.mxu0 0
    %762 = vmatmul.mubr.bf16.gmra.mxu0 %v455
    %v763 = vpop.f32.mrf.mxu0
    %v764 = vadd.f32 0.0, %v763
    %v765 = vpop.f32.mrf.mxu0
    %v766 = vpop.f32.mrf.mxu0
    %v767 = vadd.f32 0.0, %v766
    %v768 = vpop.f32.mrf.mxu0
    %769 = vmatprep.mubr.bf16.mxu0 0
    %770 = vmatmul.mubr.bf16.gmra.mxu0 %v456
    %v771 = vpop.f32.mrf.mxu0
    %v772 = vadd.f32 0.0, %v771
    %v773 = vpop.f32.mrf.mxu0
    %v774 = vpop.f32.mrf.mxu0
    %v775 = vadd.f32 0.0, %v774
    %v776 = vpop.f32.mrf.mxu0
    %777 = vmatprep.mubr.bf16.mxu0 0
    %778 = vmatmul.mubr.bf16.gmra.mxu0 %v457
    %v779 = vpop.f32.mrf.mxu0
    %v780 = vadd.f32 0.0, %v779
    %v781 = vpop.f32.mrf.mxu0
    %v782 = vpop.f32.mrf.mxu0
    %v783 = vadd.f32 0.0, %v782
    %v784 = vpop.f32.mrf.mxu0
    %785 = vmatprep.mubr.bf16.mxu0 0
    %786 = vmatmul.mubr.bf16.gmra.mxu0 %v458
    %v787 = vpop.f32.mrf.mxu0
    %v788 = vadd.f32 0.0, %v787
    %v789 = vpop.f32.mrf.mxu0
    %v790 = vpop.f32.mrf.mxu0
    %v791 = vadd.f32 0.0, %v790
    %v792 = vpop.f32.mrf.mxu0
    %793 = vmatprep.mubr.bf16.mxu0 0
    %794 = vmatmul.mubr.bf16.gmra.mxu0 %v459
    %v795 = vpop.f32.mrf.mxu0
    %v796 = vadd.f32 0.0, %v795
    %v797 = vpop.f32.mrf.mxu0
    %v798 = vpop.f32.mrf.mxu0
    %v799 = vadd.f32 0.0, %v798
    %v800 = vpop.f32.mrf.mxu0
    %801 = vmatprep.mubr.bf16.mxu0 0
    %802 = vmatmul.mubr.bf16.gmra.mxu0 %v460
    %v803 = vpop.f32.mrf.mxu0
    %v804 = vadd.f32 0.0, %v803
    %v805 = vpop.f32.mrf.mxu0
    %v806 = vpop.f32.mrf.mxu0
    %v807 = vadd.f32 0.0, %v806
    %v808 = vpop.f32.mrf.mxu0
    %809 = vmatprep.mubr.bf16.mxu0 0
    %810 = vmatmul.mubr.bf16.gmra.mxu0 %v461
    %v811 = vpop.f32.mrf.mxu0
    %v812 = vadd.f32 0.0, %v811
    %v813 = vpop.f32.mrf.mxu0
    %v814 = vpop.f32.mrf.mxu0
    %v815 = vadd.f32 0.0, %v814
    %v816 = vpop.f32.mrf.mxu0
    %817 = vmatprep.mubr.bf16.mxu0 0
    %818 = vmatmul.mubr.bf16.gmra.mxu0 %v462
    %v819 = vpop.f32.mrf.mxu0
    %v820 = vadd.f32 0.0, %v819
    %v821 = vpop.f32.mrf.mxu0
    %v822 = vpop.f32.mrf.mxu0
    %v823 = vadd.f32 0.0, %v822
    %v824 = vpop.f32.mrf.mxu0
    %825 = vmatprep.mubr.bf16.mxu0 0
    %826 = vmatmul.mubr.bf16.gmra.mxu0 %v463
    %v827 = vpop.f32.mrf.mxu0
    %v828 = vadd.f32 0.0, %v827
    %v829 = vpop.f32.mrf.mxu0
    %v830 = vpop.f32.mrf.mxu0
    %v831 = vadd.f32 0.0, %v830
    %v832 = vpop.f32.mrf.mxu0
    %833 = vmatprep.mubr.bf16.mxu0 0
    %834 = vmatmul.mubr.bf16.gmra.mxu0 %v464
    %v835 = vpop.f32.mrf.mxu0
    %v836 = vadd.f32 0.0, %v835
    %v837 = vpop.f32.mrf.mxu0
    %v838 = vpop.f32.mrf.mxu0
    %v839 = vadd.f32 0.0, %v838
    %v840 = vpop.f32.mrf.mxu0
    %841 = vmatprep.mubr.bf16.mxu0 0
    %842 = vmatmul.mubr.bf16.gmra.mxu0 %v465
    %v843 = vpop.f32.mrf.mxu0
    %v844 = vadd.f32 0.0, %v843
    %v845 = vpop.f32.mrf.mxu0
    %v846 = vpop.f32.mrf.mxu0
    %v847 = vadd.f32 0.0, %v846
    %v848 = vpop.f32.mrf.mxu0
    %849 = vmatprep.mubr.bf16.mxu0 0
    %850 = vmatmul.mubr.bf16.gmra.mxu0 %v466
    %v851 = vpop.f32.mrf.mxu0
    %v852 = vadd.f32 0.0, %v851
    %v853 = vpop.f32.mrf.mxu0
    %v854 = vpop.f32.mrf.mxu0
    %v855 = vadd.f32 0.0, %v854
    %v856 = vpop.f32.mrf.mxu0
    %857 = vmatprep.mubr.bf16.mxu0 0
    %858 = vmatmul.mubr.bf16.gmra.mxu0 %v467
    %v859 = vpop.f32.mrf.mxu0
    %v860 = vadd.f32 0.0, %v859
    %v861 = vpop.f32.mrf.mxu0
    %v862 = vpop.f32.mrf.mxu0
    %v863 = vadd.f32 0.0, %v862
    %v864 = vpop.f32.mrf.mxu0
    %865 = vmatprep.mubr.bf16.mxu0 0
    %866 = vmatmul.mubr.bf16.gmra.mxu0 %v468
    %v867 = vpop.f32.mrf.mxu0
    %v868 = vadd.f32 0.0, %v867
    %v869 = vpop.f32.mrf.mxu0
    %v870 = vpop.f32.mrf.mxu0
    %v871 = vadd.f32 0.0, %v870
    %v872 = vpop.f32.mrf.mxu0
    %873 = vmatprep.mubr.bf16.mxu0 0
    %874 = vmatmul.mubr.bf16.gmra.mxu0 %v469
    %v875 = vpop.f32.mrf.mxu0
    %v876 = vadd.f32 0.0, %v875
    %v877 = vpop.f32.mrf.mxu0
    %v878 = vpop.f32.mrf.mxu0
    %v879 = vadd.f32 0.0, %v878
    %v880 = vpop.f32.mrf.mxu0
    %881 = vmatprep.mubr.bf16.mxu0 0
    %882 = vmatmul.mubr.bf16.gmra.mxu0 %v470
    %v883 = vpop.f32.mrf.mxu0
    %v884 = vadd.f32 0.0, %v883
    %v885 = vpop.f32.mrf.mxu0
    %v886 = vpop.f32.mrf.mxu0
    %v887 = vadd.f32 0.0, %v886
    %v888 = vpop.f32.mrf.mxu0
    %889 = vmatprep.mubr.bf16.mxu0 0
    %890 = vmatmul.mubr.bf16.gmra.mxu0 %v471
    %v891 = vpop.f32.mrf.mxu0
    %v892 = vadd.f32 0.0, %v891
    %v893 = vpop.f32.mrf.mxu0
    %v894 = vpop.f32.mrf.mxu0
    %v895 = vadd.f32 0.0, %v894
    %v896 = vpop.f32.mrf.mxu0
    %897 = vmatprep.mubr.bf16.mxu0 0
    %898 = vmatmul.mubr.bf16.gmra.mxu0 %v472
    %v899 = vpop.f32.mrf.mxu0
    %v900 = vadd.f32 0.0, %v899
    %v901 = vpop.f32.mrf.mxu0
    %v902 = vpop.f32.mrf.mxu0
    %v903 = vadd.f32 0.0, %v902
    %v904 = vpop.f32.mrf.mxu0
    %905 = vmatprep.mubr.bf16.mxu0 0
    %906 = vmatmul.mubr.bf16.gmra.mxu0 %v473
    %v907 = vpop.f32.mrf.mxu0
    %v908 = vadd.f32 0.0, %v907
    %v909 = vpop.f32.mrf.mxu0
    %v910 = vpop.f32.mrf.mxu0
    %v911 = vadd.f32 0.0, %v910
    %v912 = vpop.f32.mrf.mxu0
    %913 = vmatprep.mubr.bf16.mxu0 0
    %914 = vmatmul.mubr.bf16.gmra.mxu0 %v474
    %v915 = vpop.f32.mrf.mxu0
    %v916 = vadd.f32 0.0, %v915
    %v917 = vpop.f32.mrf.mxu0
    %v918 = vpop.f32.mrf.mxu0
    %v919 = vadd.f32 0.0, %v918
    %v920 = vpop.f32.mrf.mxu0
    %921 = vmatprep.mubr.bf16.mxu0 0
    %922 = vmatmul.mubr.bf16.gmra.mxu0 %v475
    %v923 = vpop.f32.mrf.mxu0
    %v924 = vadd.f32 0.0, %v923
    %v925 = vpop.f32.mrf.mxu0
    %v926 = vpop.f32.mrf.mxu0
    %v927 = vadd.f32 0.0, %v926
    %v928 = vpop.f32.mrf.mxu0
    %929 = vmatprep.mubr.bf16.mxu0 0
    %930 = vmatmul.mubr.bf16.gmra.mxu0 %v476
    %v931 = vpop.f32.mrf.mxu0
    %v932 = vadd.f32 0.0, %v931
    %v933 = vpop.f32.mrf.mxu0
    %v934 = vpop.f32.mrf.mxu0
    %v935 = vadd.f32 0.0, %v934
    %v936 = vpop.f32.mrf.mxu0
    %937 = vmatprep.mubr.bf16.mxu0 0
    %938 = vmatmul.mubr.bf16.gmra.mxu0 %v477
    %v939 = vpop.f32.mrf.mxu0
    %v940 = vadd.f32 0.0, %v939
    %v941 = vpop.f32.mrf.mxu0
    %v942 = vpop.f32.mrf.mxu0
    %v943 = vadd.f32 0.0, %v942
    %v944 = vpop.f32.mrf.mxu0
    %945 = vmatprep.mubr.bf16.mxu0 0
    %946 = vmatmul.mubr.bf16.gmra.mxu0 %v478
    %v947 = vpop.f32.mrf.mxu0
    %v948 = vadd.f32 0.0, %v947
    %v949 = vpop.f32.mrf.mxu0
    %v950 = vpop.f32.mrf.mxu0
    %v951 = vadd.f32 0.0, %v950
    %v952 = vpop.f32.mrf.mxu0
    %953 = vmatprep.mubr.bf16.mxu0 0
    %954 = vmatmul.mubr.bf16.gmra.mxu0 %v479
    %v955 = vpop.f32.mrf.mxu0
    %v956 = vadd.f32 0.0, %v955
    %v957 = vpop.f32.mrf.mxu0
    %v958 = vpop.f32.mrf.mxu0
    %v959 = vadd.f32 0.0, %v958
    %v960 = vpop.f32.mrf.mxu0
    %961 = vmatprep.mubr.bf16.mxu0 0
    %962 = vmatmul.mubr.bf16.gmra.mxu0 %v480
    %v963 = vpop.f32.mrf.mxu0
    %v964 = vadd.f32 0.0, %v963
    %v965 = vpop.f32.mrf.mxu0
    %v966 = vpop.f32.mrf.mxu0
    %v967 = vadd.f32 0.0, %v966
    %v968 = vpop.f32.mrf.mxu0
    %969 = vmatprep.mubr.bf16.mxu0 0
    %970 = vmatmul.mubr.bf16.gmra.mxu0 %v481
    %v971 = vpop.f32.mrf.mxu0
    %v972 = vadd.f32 0.0, %v971
    %v973 = vpop.f32.mrf.mxu0
    %v974 = vpop.f32.mrf.mxu0
    %v975 = vadd.f32 0.0, %v974
    %v976 = vpop.f32.mrf.mxu0
    %977 = vmatprep.mubr.bf16.mxu0 0
    %978 = vmatmul.mubr.bf16.gmra.mxu0 %v482
    %v979 = vpop.f32.mrf.mxu0
    %v980 = vadd.f32 0.0, %v979
    %v981 = vpop.f32.mrf.mxu0
    %v982 = vpop.f32.mrf.mxu0
    %v983 = vadd.f32 0.0, %v982
    %v984 = vpop.f32.mrf.mxu0
    %985 = vmatprep.mubr.bf16.mxu0 0
    %986 = vmatmul.mubr.bf16.gmra.mxu0 %v483
    %v987 = vpop.f32.mrf.mxu0
    %v988 = vadd.f32 0.0, %v987
    %v989 = vpop.f32.mrf.mxu0
    %v990 = vpop.f32.mrf.mxu0
    %v991 = vadd.f32 0.0, %v990
    %v992 = vpop.f32.mrf.mxu0
    %993 = vmatprep.mubr.bf16.mxu0 0
    %994 = vmatmul.mubr.bf16.gmra.mxu0 %v484
    %v995 = vpop.f32.mrf.mxu0
    %v996 = vadd.f32 0.0, %v995
    %v997 = vpop.f32.mrf.mxu0
    %v998 = vpop.f32.mrf.mxu0
    %v999 = vadd.f32 0.0, %v998
    %v1000 = vpop.f32.mrf.mxu0
    %1001 = vmatprep.mubr.bf16.mxu0 0
    %1002 = vmatmul.mubr.bf16.gmra.mxu0 %v485
    %v1003 = vpop.f32.mrf.mxu0
    %v1004 = vadd.f32 0.0, %v1003
    %v1005 = vpop.f32.mrf.mxu0
    %v1006 = vpop.f32.mrf.mxu0
    %v1007 = vadd.f32 0.0, %v1006
    %v1008 = vpop.f32.mrf.mxu0
    %1009 = vmatprep.mubr.bf16.mxu0 0
    %1010 = vmatmul.mubr.bf16.gmra.mxu0 %v486
    %v1011 = vpop.f32.mrf.mxu0
    %v1012 = vadd.f32 0.0, %v1011
    %v1013 = vpop.f32.mrf.mxu0
    %v1014 = vpop.f32.mrf.mxu0
    %v1015 = vadd.f32 0.0, %v1014
    %v1016 = vpop.f32.mrf.mxu0
    %1017 = vmatprep.mubr.bf16.mxu0 0
    %1018 = vmatmul.mubr.bf16.gmra.mxu0 %v487
    %v1019 = vpop.f32.mrf.mxu0
    %v1020 = vadd.f32 0.0, %v1019
    %v1021 = vpop.f32.mrf.mxu0
    %v1022 = vpop.f32.mrf.mxu0
    %v1023 = vadd.f32 0.0, %v1022
    %v1024 = vpop.f32.mrf.mxu0
    %1025 = vmatprep.mubr.bf16.mxu0 0
    %1026 = vmatmul.mubr.bf16.gmra.mxu0 %v488
    %v1027 = vpop.f32.mrf.mxu0
    %v1028 = vadd.f32 0.0, %v1027
    %v1029 = vpop.f32.mrf.mxu0
    %v1030 = vpop.f32.mrf.mxu0
    %v1031 = vadd.f32 0.0, %v1030
    %v1032 = vpop.f32.mrf.mxu0
    %1033 = vmatprep.mubr.bf16.mxu0 0
    %1034 = vmatmul.mubr.bf16.gmra.mxu0 %v489
    %v1035 = vpop.f32.mrf.mxu0
    %v1036 = vadd.f32 0.0, %v1035
    %v1037 = vpop.f32.mrf.mxu0
    %v1038 = vpop.f32.mrf.mxu0
    %v1039 = vadd.f32 0.0, %v1038
    %v1040 = vpop.f32.mrf.mxu0
    %1041 = vmatprep.mubr.bf16.mxu0 0
    %1042 = vmatmul.mubr.bf16.gmra.mxu0 %v490
    %v1043 = vpop.f32.mrf.mxu0
    %v1044 = vadd.f32 0.0, %v1043
    %v1045 = vpop.f32.mrf.mxu0
    %v1046 = vpop.f32.mrf.mxu0
    %v1047 = vadd.f32 0.0, %v1046
    %v1048 = vpop.f32.mrf.mxu0
    %1049 = vmatprep.mubr.bf16.mxu0 0
    %1050 = vmatmul.mubr.bf16.gmra.mxu0 %v491
    %v1051 = vpop.f32.mrf.mxu0
    %v1052 = vadd.f32 0.0, %v1051
    %v1053 = vpop.f32.mrf.mxu0
    %v1054 = vpop.f32.mrf.mxu0
    %v1055 = vadd.f32 0.0, %v1054
    %v1056 = vpop.f32.mrf.mxu0
    %1057 = vmatprep.mubr.bf16.mxu0 0
    %1058 = vmatmul.mubr.bf16.gmra.mxu0 %v492
    %v1059 = vpop.f32.mrf.mxu0
    %v1060 = vadd.f32 0.0, %v1059
    %v1061 = vpop.f32.mrf.mxu0
    %v1062 = vpop.f32.mrf.mxu0
    %v1063 = vadd.f32 0.0, %v1062
    %v1064 = vpop.f32.mrf.mxu0
    %1065 = vmatprep.mubr.bf16.mxu0 0
    %1066 = vmatmul.mubr.bf16.gmra.mxu0 %v493
    %v1067 = vpop.f32.mrf.mxu0
    %v1068 = vadd.f32 0.0, %v1067
    %v1069 = vpop.f32.mrf.mxu0
    %v1070 = vpop.f32.mrf.mxu0
    %v1071 = vadd.f32 0.0, %v1070
    %v1072 = vpop.f32.mrf.mxu0
    %1073 = vmatprep.mubr.bf16.mxu0 0
    %1074 = vmatmul.mubr.bf16.gmra.mxu0 %v494
    %v1075 = vpop.f32.mrf.mxu0
    %v1076 = vadd.f32 0.0, %v1075
    %v1077 = vpop.f32.mrf.mxu0
    %v1078 = vpop.f32.mrf.mxu0
    %v1079 = vadd.f32 0.0, %v1078
    %v1080 = vpop.f32.mrf.mxu0
    %1081 = vmatprep.mubr.bf16.mxu0 0
    %1082 = vmatmul.mubr.bf16.gmra.mxu0 %v495
    %v1083 = vpop.f32.mrf.mxu0
    %v1084 = vadd.f32 0.0, %v1083
    %v1085 = vpop.f32.mrf.mxu0
    %v1086 = vpop.f32.mrf.mxu0
    %v1087 = vadd.f32 0.0, %v1086
    %v1088 = vpop.f32.mrf.mxu0
    %1089 = vmatprep.mubr.bf16.mxu0 0
    %1090 = vmatmul.mubr.bf16.gmra.mxu0 %v496
    %v1091 = vpop.f32.mrf.mxu0
    %v1092 = vadd.f32 0.0, %v1091
    %v1093 = vpop.f32.mrf.mxu0
    %v1094 = vpop.f32.mrf.mxu0
    %v1095 = vadd.f32 0.0, %v1094
    %v1096 = vpop.f32.mrf.mxu0
    %1097 = vmatprep.mubr.bf16.mxu0 0
    %1098 = vmatmul.mubr.bf16.gmra.mxu0 %v497
    %v1099 = vpop.f32.mrf.mxu0
    %v1100 = vadd.f32 0.0, %v1099
    %v1101 = vpop.f32.mrf.mxu0
    %v1102 = vpop.f32.mrf.mxu0
    %v1103 = vadd.f32 0.0, %v1102
    %v1104 = vpop.f32.mrf.mxu0
    %1105 = vmatprep.mubr.bf16.mxu0 0
    %1106 = vmatmul.mubr.bf16.gmra.mxu0 %v498
    %v1107 = vpop.f32.mrf.mxu0
    %v1108 = vadd.f32 0.0, %v1107
    %v1109 = vpop.f32.mrf.mxu0
    %v1110 = vpop.f32.mrf.mxu0
    %v1111 = vadd.f32 0.0, %v1110
    %v1112 = vpop.f32.mrf.mxu0
    %1113 = vmatprep.mubr.bf16.mxu0 0
    %1114 = vmatmul.mubr.bf16.gmra.mxu0 %v499
    %v1115 = vpop.f32.mrf.mxu0
    %v1116 = vadd.f32 0.0, %v1115
    %v1117 = vpop.f32.mrf.mxu0
    %v1118 = vpop.f32.mrf.mxu0
    %v1119 = vadd.f32 0.0, %v1118
    %v1120 = vpop.f32.mrf.mxu0
    %1121 = vmatprep.mubr.bf16.mxu0 0
    %1122 = vmatmul.mubr.bf16.gmra.mxu0 %v500
    %v1123 = vpop.f32.mrf.mxu0
    %v1124 = vadd.f32 0.0, %v1123
    %v1125 = vpop.f32.mrf.mxu0
    %v1126 = vpop.f32.mrf.mxu0
    %v1127 = vadd.f32 0.0, %v1126
    %v1128 = vpop.f32.mrf.mxu0
    %1129 = vmatprep.mubr.bf16.mxu0 0
    %1130 = vmatmul.mubr.bf16.gmra.mxu0 %v501
    %v1131 = vpop.f32.mrf.mxu0
    %v1132 = vadd.f32 0.0, %v1131
    %v1133 = vpop.f32.mrf.mxu0
    %v1134 = vpop.f32.mrf.mxu0
    %v1135 = vadd.f32 0.0, %v1134
    %v1136 = vpop.f32.mrf.mxu0
    %1137 = vmatprep.mubr.bf16.mxu0 0
    %1138 = vmatmul.mubr.bf16.gmra.mxu0 %v502
    %v1139 = vpop.f32.mrf.mxu0
    %v1140 = vadd.f32 0.0, %v1139
    %v1141 = vpop.f32.mrf.mxu0
    %v1142 = vpop.f32.mrf.mxu0
    %v1143 = vadd.f32 0.0, %v1142
    %v1144 = vpop.f32.mrf.mxu0
    %1145 = vmatprep.mubr.bf16.mxu0 0
    %1146 = vmatmul.mubr.bf16.gmra.mxu0 %v503
    %v1147 = vpop.f32.mrf.mxu0
    %v1148 = vadd.f32 0.0, %v1147
    %v1149 = vpop.f32.mrf.mxu0
    %v1150 = vpop.f32.mrf.mxu0
    %v1151 = vadd.f32 0.0, %v1150
    %v1152 = vpop.f32.mrf.mxu0
    %1153 = vmatprep.mubr.bf16.mxu0 0
    %1154 = vmatmul.mubr.bf16.gmra.mxu0 %v504
    %v1155 = vpop.f32.mrf.mxu0
    %v1156 = vadd.f32 0.0, %v1155
    %v1157 = vpop.f32.mrf.mxu0
    %v1158 = vpop.f32.mrf.mxu0
    %v1159 = vadd.f32 0.0, %v1158
    %v1160 = vpop.f32.mrf.mxu0
    %1161 = vdwg.mxu0
    %v1162 = vpack.c.bf16 %v655, %v652
    %v1163 = vpack.c.bf16 %v663, %v660
    %v1164 = vpack.c.bf16 %v671, %v668
    %v1165 = vpack.c.bf16 %v679, %v676
    %v1166 = vpack.c.bf16 %v687, %v684
    %v1167 = vpack.c.bf16 %v695, %v692
    %v1168 = vpack.c.bf16 %v703, %v700
    %v1169 = vpack.c.bf16 %v711, %v708
    %v1170 = vpack.c.bf16 %v719, %v716
    %v1171 = vpack.c.bf16 %v727, %v724
    %v1172 = vpack.c.bf16 %v735, %v732
    %v1173 = vpack.c.bf16 %v743, %v740
    %v1174 = vpack.c.bf16 %v751, %v748
    %v1175 = vpack.c.bf16 %v759, %v756
    %v1176 = vpack.c.bf16 %v767, %v764
    %v1177 = vpack.c.bf16 %v775, %v772
    %v1178 = vpack.c.bf16 %v783, %v780
    %v1179 = vpack.c.bf16 %v791, %v788
    %v1180 = vpack.c.bf16 %v799, %v796
    %v1181 = vpack.c.bf16 %v807, %v804
    %v1182 = vpack.c.bf16 %v815, %v812
    %v1183 = vpack.c.bf16 %v823, %v820
    %v1184 = vpack.c.bf16 %v831, %v828
    %v1185 = vpack.c.bf16 %v839, %v836
    %v1186 = vpack.c.bf16 %v847, %v844
    %v1187 = vpack.c.bf16 %v855, %v852
    %v1188 = vpack.c.bf16 %v863, %v860
    %v1189 = vpack.c.bf16 %v871, %v868
    %v1190 = vpack.c.bf16 %v879, %v876
    %v1191 = vpack.c.bf16 %v887, %v884
    %v1192 = vpack.c.bf16 %v895, %v892
    %v1193 = vpack.c.bf16 %v903, %v900
    %v1194 = vpack.c.bf16 %v911, %v908
    %v1195 = vpack.c.bf16 %v919, %v916
    %v1196 = vpack.c.bf16 %v927, %v924
    %v1197 = vpack.c.bf16 %v935, %v932
    %v1198 = vpack.c.bf16 %v943, %v940
    %v1199 = vpack.c.bf16 %v951, %v948
    %v1200 = vpack.c.bf16 %v959, %v956
    %v1201 = vpack.c.bf16 %v967, %v964
    %v1202 = vpack.c.bf16 %v975, %v972
    %v1203 = vpack.c.bf16 %v983, %v980
    %v1204 = vpack.c.bf16 %v991, %v988
    %v1205 = vpack.c.bf16 %v999, %v996
    %v1206 = vpack.c.bf16 %v1007, %v1004
    %v1207 = vpack.c.bf16 %v1015, %v1012
    %v1208 = vpack.c.bf16 %v1023, %v1020
    %v1209 = vpack.c.bf16 %v1031, %v1028
    %v1210 = vpack.c.bf16 %v1039, %v1036
    %v1211 = vpack.c.bf16 %v1047, %v1044
    %v1212 = vpack.c.bf16 %v1055, %v1052
    %v1213 = vpack.c.bf16 %v1063, %v1060
    %v1214 = vpack.c.bf16 %v1071, %v1068
    %v1215 = vpack.c.bf16 %v1079, %v1076
    %v1216 = vpack.c.bf16 %v1087, %v1084
    %v1217 = vpack.c.bf16 %v1095, %v1092
    %v1218 = vpack.c.bf16 %v1103, %v1100
    %v1219 = vpack.c.bf16 %v1111, %v1108
    %v1220 = vpack.c.bf16 %v1119, %v1116
    %v1221 = vpack.c.bf16 %v1127, %v1124
    %v1222 = vpack.c.bf16 %v1135, %v1132
    %v1223 = vpack.c.bf16 %v1143, %v1140
    %v1224 = vpack.c.bf16 %v1151, %v1148
    %v1225 = vpack.c.bf16 %v1159, %v1156
    %v1290 = vunpack.c.l.b16 %v1162
    %v1291 = vunpack.c.h.b16 %v1162
    %v1292 = vunpack.c.l.b16 %v1163
    %v1293 = vunpack.c.h.b16 %v1163
    %v1294 = vunpack.c.l.b16 %v1164
    %v1295 = vunpack.c.h.b16 %v1164
    %v1296 = vunpack.c.l.b16 %v1165
    %v1297 = vunpack.c.h.b16 %v1165
    %v1298 = vunpack.c.l.b16 %v1166
    %v1299 = vunpack.c.h.b16 %v1166
    %v1300 = vunpack.c.l.b16 %v1167
    %v1301 = vunpack.c.h.b16 %v1167
    %v1302 = vunpack.c.l.b16 %v1168
    %v1303 = vunpack.c.h.b16 %v1168
    %v1304 = vunpack.c.l.b16 %v1169
    %v1305 = vunpack.c.h.b16 %v1169
    %v1306 = vunpack.c.l.b16 %v1170
    %v1307 = vunpack.c.h.b16 %v1170
    %v1308 = vunpack.c.l.b16 %v1171
    %v1309 = vunpack.c.h.b16 %v1171
    %v1310 = vunpack.c.l.b16 %v1172
    %v1311 = vunpack.c.h.b16 %v1172
    %v1312 = vunpack.c.l.b16 %v1173
    %v1313 = vunpack.c.h.b16 %v1173
    %v1314 = vunpack.c.l.b16 %v1174
    %v1315 = vunpack.c.h.b16 %v1174
    %v1316 = vunpack.c.l.b16 %v1175
    %v1317 = vunpack.c.h.b16 %v1175
    %v1318 = vunpack.c.l.b16 %v1176
    %v1319 = vunpack.c.h.b16 %v1176
    %v1320 = vunpack.c.l.b16 %v1177
    %v1321 = vunpack.c.h.b16 %v1177
    %v1322 = vunpack.c.l.b16 %v1178
    %v1323 = vunpack.c.h.b16 %v1178
    %v1324 = vunpack.c.l.b16 %v1179
    %v1325 = vunpack.c.h.b16 %v1179
    %v1326 = vunpack.c.l.b16 %v1180
    %v1327 = vunpack.c.h.b16 %v1180
    %v1328 = vunpack.c.l.b16 %v1181
    %v1329 = vunpack.c.h.b16 %v1181
    %v1330 = vunpack.c.l.b16 %v1182
    %v1331 = vunpack.c.h.b16 %v1182
    %v1332 = vunpack.c.l.b16 %v1183
    %v1333 = vunpack.c.h.b16 %v1183
    %v1334 = vunpack.c.l.b16 %v1184
    %v1335 = vunpack.c.h.b16 %v1184
    %v1336 = vunpack.c.l.b16 %v1185
    %v1337 = vunpack.c.h.b16 %v1185
    %v1338 = vunpack.c.l.b16 %v1186
    %v1339 = vunpack.c.h.b16 %v1186
    %v1340 = vunpack.c.l.b16 %v1187
    %v1341 = vunpack.c.h.b16 %v1187
    %v1342 = vunpack.c.l.b16 %v1188
    %v1343 = vunpack.c.h.b16 %v1188
    %v1344 = vunpack.c.l.b16 %v1189
    %v1345 = vunpack.c.h.b16 %v1189
    %v1346 = vunpack.c.l.b16 %v1190
    %v1347 = vunpack.c.h.b16 %v1190
    %v1348 = vunpack.c.l.b16 %v1191
    %v1349 = vunpack.c.h.b16 %v1191
    %v1350 = vunpack.c.l.b16 %v1192
    %v1351 = vunpack.c.h.b16 %v1192
    %v1352 = vunpack.c.l.b16 %v1193
    %v1353 = vunpack.c.h.b16 %v1193
    %v1354 = vunpack.c.l.b16 %v1194
    %v1355 = vunpack.c.h.b16 %v1194
    %v1356 = vunpack.c.l.b16 %v1195
    %v1357 = vunpack.c.h.b16 %v1195
    %v1358 = vunpack.c.l.b16 %v1196
    %v1359 = vunpack.c.h.b16 %v1196
    %v1360 = vunpack.c.l.b16 %v1197
    %v1361 = vunpack.c.h.b16 %v1197
    %v1362 = vunpack.c.l.b16 %v1198
    %v1363 = vunpack.c.h.b16 %v1198
    %v1364 = vunpack.c.l.b16 %v1199
    %v1365 = vunpack.c.h.b16 %v1199
    %v1366 = vunpack.c.l.b16 %v1200
    %v1367 = vunpack.c.h.b16 %v1200
    %v1368 = vunpack.c.l.b16 %v1201
    %v1369 = vunpack.c.h.b16 %v1201
    %v1370 = vunpack.c.l.b16 %v1202
    %v1371 = vunpack.c.h.b16 %v1202
    %v1372 = vunpack.c.l.b16 %v1203
    %v1373 = vunpack.c.h.b16 %v1203
    %v1374 = vunpack.c.l.b16 %v1204
    %v1375 = vunpack.c.h.b16 %v1204
    %v1376 = vunpack.c.l.b16 %v1205
    %v1377 = vunpack.c.h.b16 %v1205
    %v1378 = vunpack.c.l.b16 %v1206
    %v1379 = vunpack.c.h.b16 %v1206
    %v1380 = vunpack.c.l.b16 %v1207
    %v1381 = vunpack.c.h.b16 %v1207
    %v1382 = vunpack.c.l.b16 %v1208
    %v1383 = vunpack.c.h.b16 %v1208
    %v1384 = vunpack.c.l.b16 %v1209
    %v1385 = vunpack.c.h.b16 %v1209
    %v1386 = vunpack.c.l.b16 %v1210
    %v1387 = vunpack.c.h.b16 %v1210
    %v1388 = vunpack.c.l.b16 %v1211
    %v1389 = vunpack.c.h.b16 %v1211
    %v1390 = vunpack.c.l.b16 %v1212
    %v1391 = vunpack.c.h.b16 %v1212
    %v1392 = vunpack.c.l.b16 %v1213
    %v1393 = vunpack.c.h.b16 %v1213
    %v1394 = vunpack.c.l.b16 %v1214
    %v1395 = vunpack.c.h.b16 %v1214
    %v1396 = vunpack.c.l.b16 %v1215
    %v1397 = vunpack.c.h.b16 %v1215
    %v1398 = vunpack.c.l.b16 %v1216
    %v1399 = vunpack.c.h.b16 %v1216
    %v1400 = vunpack.c.l.b16 %v1217
    %v1401 = vunpack.c.h.b16 %v1217
    %v1402 = vunpack.c.l.b16 %v1218
    %v1403 = vunpack.c.h.b16 %v1218
    %v1404 = vunpack.c.l.b16 %v1219
    %v1405 = vunpack.c.h.b16 %v1219
    %v1406 = vunpack.c.l.b16 %v1220
    %v1407 = vunpack.c.h.b16 %v1220
    %v1408 = vunpack.c.l.b16 %v1221
    %v1409 = vunpack.c.h.b16 %v1221
    %v1410 = vunpack.c.l.b16 %v1222
    %v1411 = vunpack.c.h.b16 %v1222
    %v1412 = vunpack.c.l.b16 %v1223
    %v1413 = vunpack.c.h.b16 %v1223
    %v1414 = vunpack.c.l.b16 %v1224
    %v1415 = vunpack.c.h.b16 %v1224
    %v1416 = vunpack.c.l.b16 %v1225
    %v1417 = vunpack.c.h.b16 %v1225
    %v1418 = vpack.c.b16 %v1290, %v1290
    %v1419 = vpack.c.b16 %v1291, %v1291
    %v1420 = vpack.c.b16 %v1292, %v1292
    %v1421 = vpack.c.b16 %v1293, %v1293
    %v1422 = vpack.c.b16 %v1294, %v1294
    %v1423 = vpack.c.b16 %v1295, %v1295
    %v1424 = vpack.c.b16 %v1296, %v1296
    %v1425 = vpack.c.b16 %v1297, %v1297
    %v1426 = vpack.c.b16 %v1298, %v1298
    %v1427 = vpack.c.b16 %v1299, %v1299
    %v1428 = vpack.c.b16 %v1300, %v1300
    %v1429 = vpack.c.b16 %v1301, %v1301
    %v1430 = vpack.c.b16 %v1302, %v1302
    %v1431 = vpack.c.b16 %v1303, %v1303
    %v1432 = vpack.c.b16 %v1304, %v1304
    %v1433 = vpack.c.b16 %v1305, %v1305
    %v1434 = vpack.c.b16 %v1306, %v1306
    %v1435 = vpack.c.b16 %v1307, %v1307
    %v1436 = vpack.c.b16 %v1308, %v1308
    %v1437 = vpack.c.b16 %v1309, %v1309
    %v1438 = vpack.c.b16 %v1310, %v1310
    %v1439 = vpack.c.b16 %v1311, %v1311
    %v1440 = vpack.c.b16 %v1312, %v1312
    %v1441 = vpack.c.b16 %v1313, %v1313
    %v1442 = vpack.c.b16 %v1314, %v1314
    %v1443 = vpack.c.b16 %v1315, %v1315
    %v1444 = vpack.c.b16 %v1316, %v1316
    %v1445 = vpack.c.b16 %v1317, %v1317
    %v1446 = vpack.c.b16 %v1318, %v1318
    %v1447 = vpack.c.b16 %v1319, %v1319
    %v1448 = vpack.c.b16 %v1320, %v1320
    %v1449 = vpack.c.b16 %v1321, %v1321
    %v1450 = vpack.c.b16 %v1322, %v1322
    %v1451 = vpack.c.b16 %v1323, %v1323
    %v1452 = vpack.c.b16 %v1324, %v1324
    %v1453 = vpack.c.b16 %v1325, %v1325
    %v1454 = vpack.c.b16 %v1326, %v1326
    %v1455 = vpack.c.b16 %v1327, %v1327
    %v1456 = vpack.c.b16 %v1328, %v1328
    %v1457 = vpack.c.b16 %v1329, %v1329
    %v1458 = vpack.c.b16 %v1330, %v1330
    %v1459 = vpack.c.b16 %v1331, %v1331
    %v1460 = vpack.c.b16 %v1332, %v1332
    %v1461 = vpack.c.b16 %v1333, %v1333
    %v1462 = vpack.c.b16 %v1334, %v1334
    %v1463 = vpack.c.b16 %v1335, %v1335
    %v1464 = vpack.c.b16 %v1336, %v1336
    %v1465 = vpack.c.b16 %v1337, %v1337
    %v1466 = vpack.c.b16 %v1338, %v1338
    %v1467 = vpack.c.b16 %v1339, %v1339
    %v1468 = vpack.c.b16 %v1340, %v1340
    %v1469 = vpack.c.b16 %v1341, %v1341
    %v1470 = vpack.c.b16 %v1342, %v1342
    %v1471 = vpack.c.b16 %v1343, %v1343
    %v1472 = vpack.c.b16 %v1344, %v1344
    %v1473 = vpack.c.b16 %v1345, %v1345
    %v1474 = vpack.c.b16 %v1346, %v1346
    %v1475 = vpack.c.b16 %v1347, %v1347
    %v1476 = vpack.c.b16 %v1348, %v1348
    %v1477 = vpack.c.b16 %v1349, %v1349
    %v1478 = vpack.c.b16 %v1350, %v1350
    %v1479 = vpack.c.b16 %v1351, %v1351
    %v1480 = vpack.c.b16 %v1352, %v1352
    %v1481 = vpack.c.b16 %v1353, %v1353
    %v1482 = vpack.c.b16 %v1354, %v1354
    %v1483 = vpack.c.b16 %v1355, %v1355
    %v1484 = vpack.c.b16 %v1356, %v1356
    %v1485 = vpack.c.b16 %v1357, %v1357
    %v1486 = vpack.c.b16 %v1358, %v1358
    %v1487 = vpack.c.b16 %v1359, %v1359
    %v1488 = vpack.c.b16 %v1360, %v1360
    %v1489 = vpack.c.b16 %v1361, %v1361
    %v1490 = vpack.c.b16 %v1362, %v1362
    %v1491 = vpack.c.b16 %v1363, %v1363
    %v1492 = vpack.c.b16 %v1364, %v1364
    %v1493 = vpack.c.b16 %v1365, %v1365
    %v1494 = vpack.c.b16 %v1366, %v1366
    %v1495 = vpack.c.b16 %v1367, %v1367
    %v1496 = vpack.c.b16 %v1368, %v1368
    %v1497 = vpack.c.b16 %v1369, %v1369
    %v1498 = vpack.c.b16 %v1370, %v1370
    %v1499 = vpack.c.b16 %v1371, %v1371
    %v1500 = vpack.c.b16 %v1372, %v1372
    %v1501 = vpack.c.b16 %v1373, %v1373
    %v1502 = vpack.c.b16 %v1374, %v1374
    %v1503 = vpack.c.b16 %v1375, %v1375
    %v1504 = vpack.c.b16 %v1376, %v1376
    %v1505 = vpack.c.b16 %v1377, %v1377
    %v1506 = vpack.c.b16 %v1378, %v1378
    %v1507 = vpack.c.b16 %v1379, %v1379
    %v1508 = vpack.c.b16 %v1380, %v1380
    %v1509 = vpack.c.b16 %v1381, %v1381
    %v1510 = vpack.c.b16 %v1382, %v1382
    %v1511 = vpack.c.b16 %v1383, %v1383
    %v1512 = vpack.c.b16 %v1384, %v1384
    %v1513 = vpack.c.b16 %v1385, %v1385
    %v1514 = vpack.c.b16 %v1386, %v1386
    %v1515 = vpack.c.b16 %v1387, %v1387
    %v1516 = vpack.c.b16 %v1388, %v1388
    %v1517 = vpack.c.b16 %v1389, %v1389
    %v1518 = vpack.c.b16 %v1390, %v1390
    %v1519 = vpack.c.b16 %v1391, %v1391
    %v1520 = vpack.c.b16 %v1392, %v1392
    %v1521 = vpack.c.b16 %v1393, %v1393
    %v1522 = vpack.c.b16 %v1394, %v1394
    %v1523 = vpack.c.b16 %v1395, %v1395
    %v1524 = vpack.c.b16 %v1396, %v1396
    %v1525 = vpack.c.b16 %v1397, %v1397
    %v1526 = vpack.c.b16 %v1398, %v1398
    %v1527 = vpack.c.b16 %v1399, %v1399
    %v1528 = vpack.c.b16 %v1400, %v1400
    %v1529 = vpack.c.b16 %v1401, %v1401
    %v1530 = vpack.c.b16 %v1402, %v1402
    %v1531 = vpack.c.b16 %v1403, %v1403
    %v1532 = vpack.c.b16 %v1404, %v1404
    %v1533 = vpack.c.b16 %v1405, %v1405
    %v1534 = vpack.c.b16 %v1406, %v1406
    %v1535 = vpack.c.b16 %v1407, %v1407
    %v1536 = vpack.c.b16 %v1408, %v1408
    %v1537 = vpack.c.b16 %v1409, %v1409
    %v1538 = vpack.c.b16 %v1410, %v1410
    %v1539 = vpack.c.b16 %v1411, %v1411
    %v1540 = vpack.c.b16 %v1412, %v1412
    %v1541 = vpack.c.b16 %v1413, %v1413
    %v1542 = vpack.c.b16 %v1414, %v1414
    %v1543 = vpack.c.b16 %v1415, %v1415
    %v1544 = vpack.c.b16 %v1416, %v1416
    %v1545 = vpack.c.b16 %v1417, %v1417
    %1674 = vst [vmem:[#allocation7] sm:$0xf] %v1418
    %1675 = vst [vmem:[#allocation7 + $0x4] sm:$0xf] %v1419
    %1676 = vst [vmem:[#allocation7 + $0x8] sm:$0xf] %v1420
    %1677 = vst [vmem:[#allocation7 + $0xc] sm:$0xf] %v1421
    %1678 = vst [vmem:[#allocation7 + $0x10] sm:$0xf] %v1422
    %1679 = vst [vmem:[#allocation7 + $0x14] sm:$0xf] %v1423
    %1680 = vst [vmem:[#allocation7 + $0x18] sm:$0xf] %v1424
    %1681 = vst [vmem:[#allocation7 + $0x1c] sm:$0xf] %v1425
    %1682 = vst [vmem:[#allocation7 + $0x20] sm:$0xf] %v1426
    %1683 = vst [vmem:[#allocation7 + $0x24] sm:$0xf] %v1427
    %1684 = vst [vmem:[#allocation7 + $0x28] sm:$0xf] %v1428
    %1685 = vst [vmem:[#allocation7 + $0x2c] sm:$0xf] %v1429
    %1686 = vst [vmem:[#allocation7 + $0x30] sm:$0xf] %v1430
    %1687 = vst [vmem:[#allocation7 + $0x34] sm:$0xf] %v1431
    %1688 = vst [vmem:[#allocation7 + $0x38] sm:$0xf] %v1432
    %1689 = vst [vmem:[#allocation7 + $0x3c] sm:$0xf] %v1433
    %1690 = vst [vmem:[#allocation7 + $0x40] sm:$0xf] %v1434
    %1691 = vst [vmem:[#allocation7 + $0x44] sm:$0xf] %v1435
    %1692 = vst [vmem:[#allocation7 + $0x48] sm:$0xf] %v1436
    %1693 = vst [vmem:[#allocation7 + $0x4c] sm:$0xf] %v1437
    %1694 = vst [vmem:[#allocation7 + $0x50] sm:$0xf] %v1438
    %1695 = vst [vmem:[#allocation7 + $0x54] sm:$0xf] %v1439
    %1696 = vst [vmem:[#allocation7 + $0x58] sm:$0xf] %v1440
    %1697 = vst [vmem:[#allocation7 + $0x5c] sm:$0xf] %v1441
    %1698 = vst [vmem:[#allocation7 + $0x60] sm:$0xf] %v1442
    %1699 = vst [vmem:[#allocation7 + $0x64] sm:$0xf] %v1443
    %1700 = vst [vmem:[#allocation7 + $0x68] sm:$0xf] %v1444
    %1701 = vst [vmem:[#allocation7 + $0x6c] sm:$0xf] %v1445
    %1702 = vst [vmem:[#allocation7 + $0x70] sm:$0xf] %v1446
    %1703 = vst [vmem:[#allocation7 + $0x74] sm:$0xf] %v1447
    %1704 = vst [vmem:[#allocation7 + $0x78] sm:$0xf] %v1448
    %1705 = vst [vmem:[#allocation7 + $0x7c] sm:$0xf] %v1449
    %1706 = vst [vmem:[#allocation7 + $0x80] sm:$0xf] %v1450
    %1707 = vst [vmem:[#allocation7 + $0x84] sm:$0xf] %v1451
    %1708 = vst [vmem:[#allocation7 + $0x88] sm:$0xf] %v1452
    %1709 = vst [vmem:[#allocation7 + $0x8c] sm:$0xf] %v1453
    %1710 = vst [vmem:[#allocation7 + $0x90] sm:$0xf] %v1454
    %1711 = vst [vmem:[#allocation7 + $0x94] sm:$0xf] %v1455
    %1712 = vst [vmem:[#allocation7 + $0x98] sm:$0xf] %v1456
    %1713 = vst [vmem:[#allocation7 + $0x9c] sm:$0xf] %v1457
    %1714 = vst [vmem:[#allocation7 + $0xa0] sm:$0xf] %v1458
    %1715 = vst [vmem:[#allocation7 + $0xa4] sm:$0xf] %v1459
    %1716 = vst [vmem:[#allocation7 + $0xa8] sm:$0xf] %v1460
    %1717 = vst [vmem:[#allocation7 + $0xac] sm:$0xf] %v1461
    %1718 = vst [vmem:[#allocation7 + $0xb0] sm:$0xf] %v1462
    %1719 = vst [vmem:[#allocation7 + $0xb4] sm:$0xf] %v1463
    %1720 = vst [vmem:[#allocation7 + $0xb8] sm:$0xf] %v1464
    %1721 = vst [vmem:[#allocation7 + $0xbc] sm:$0xf] %v1465
    %1722 = vst [vmem:[#allocation7 + $0xc0] sm:$0xf] %v1466
    %1723 = vst [vmem:[#allocation7 + $0xc4] sm:$0xf] %v1467
    %1724 = vst [vmem:[#allocation7 + $0xc8] sm:$0xf] %v1468
    %1725 = vst [vmem:[#allocation7 + $0xcc] sm:$0xf] %v1469
    %1726 = vst [vmem:[#allocation7 + $0xd0] sm:$0xf] %v1470
    %1727 = vst [vmem:[#allocation7 + $0xd4] sm:$0xf] %v1471
    %1728 = vst [vmem:[#allocation7 + $0xd8] sm:$0xf] %v1472
    %1729 = vst [vmem:[#allocation7 + $0xdc] sm:$0xf] %v1473
    %1730 = vst [vmem:[#allocation7 + $0xe0] sm:$0xf] %v1474
    %1731 = vst [vmem:[#allocation7 + $0xe4] sm:$0xf] %v1475
    %1732 = vst [vmem:[#allocation7 + $0xe8] sm:$0xf] %v1476
    %1733 = vst [vmem:[#allocation7 + $0xec] sm:$0xf] %v1477
    %1734 = vst [vmem:[#allocation7 + $0xf0] sm:$0xf] %v1478
    %1735 = vst [vmem:[#allocation7 + $0xf4] sm:$0xf] %v1479
    %1736 = vst [vmem:[#allocation7 + $0xf8] sm:$0xf] %v1480
    %1737 = vst [vmem:[#allocation7 + $0xfc] sm:$0xf] %v1481
    %1738 = vst [vmem:[#allocation7 + $0x100] sm:$0xf] %v1482
    %1739 = vst [vmem:[#allocation7 + $0x104] sm:$0xf] %v1483
    %1740 = vst [vmem:[#allocation7 + $0x108] sm:$0xf] %v1484
    %1741 = vst [vmem:[#allocation7 + $0x10c] sm:$0xf] %v1485
    %1742 = vst [vmem:[#allocation7 + $0x110] sm:$0xf] %v1486
    %1743 = vst [vmem:[#allocation7 + $0x114] sm:$0xf] %v1487
    %1744 = vst [vmem:[#allocation7 + $0x118] sm:$0xf] %v1488
    %1745 = vst [vmem:[#allocation7 + $0x11c] sm:$0xf] %v1489
    %1746 = vst [vmem:[#allocation7 + $0x120] sm:$0xf] %v1490
    %1747 = vst [vmem:[#allocation7 + $0x124] sm:$0xf] %v1491
    %1748 = vst [vmem:[#allocation7 + $0x128] sm:$0xf] %v1492
    %1749 = vst [vmem:[#allocation7 + $0x12c] sm:$0xf] %v1493
    %1750 = vst [vmem:[#allocation7 + $0x130] sm:$0xf] %v1494
    %1751 = vst [vmem:[#allocation7 + $0x134] sm:$0xf] %v1495
    %1752 = vst [vmem:[#allocation7 + $0x138] sm:$0xf] %v1496
    %1753 = vst [vmem:[#allocation7 + $0x13c] sm:$0xf] %v1497
    %1754 = vst [vmem:[#allocation7 + $0x140] sm:$0xf] %v1498
    %1755 = vst [vmem:[#allocation7 + $0x144] sm:$0xf] %v1499
    %1756 = vst [vmem:[#allocation7 + $0x148] sm:$0xf] %v1500
    %1757 = vst [vmem:[#allocation7 + $0x14c] sm:$0xf] %v1501
    %1758 = vst [vmem:[#allocation7 + $0x150] sm:$0xf] %v1502
    %1759 = vst [vmem:[#allocation7 + $0x154] sm:$0xf] %v1503
    %1760 = vst [vmem:[#allocation7 + $0x158] sm:$0xf] %v1504
    %1761 = vst [vmem:[#allocation7 + $0x15c] sm:$0xf] %v1505
    %1762 = vst [vmem:[#allocation7 + $0x160] sm:$0xf] %v1506
    %1763 = vst [vmem:[#allocation7 + $0x164] sm:$0xf] %v1507
    %1764 = vst [vmem:[#allocation7 + $0x168] sm:$0xf] %v1508
    %1765 = vst [vmem:[#allocation7 + $0x16c] sm:$0xf] %v1509
    %1766 = vst [vmem:[#allocation7 + $0x170] sm:$0xf] %v1510
    %1767 = vst [vmem:[#allocation7 + $0x174] sm:$0xf] %v1511
    %1768 = vst [vmem:[#allocation7 + $0x178] sm:$0xf] %v1512
    %1769 = vst [vmem:[#allocation7 + $0x17c] sm:$0xf] %v1513
    %1770 = vst [vmem:[#allocation7 + $0x180] sm:$0xf] %v1514
    %1771 = vst [vmem:[#allocation7 + $0x184] sm:$0xf] %v1515
    %1772 = vst [vmem:[#allocation7 + $0x188] sm:$0xf] %v1516
    %1773 = vst [vmem:[#allocation7 + $0x18c] sm:$0xf] %v1517
    %1774 = vst [vmem:[#allocation7 + $0x190] sm:$0xf] %v1518
    %1775 = vst [vmem:[#allocation7 + $0x194] sm:$0xf] %v1519
    %1776 = vst [vmem:[#allocation7 + $0x198] sm:$0xf] %v1520
    %1777 = vst [vmem:[#allocation7 + $0x19c] sm:$0xf] %v1521
    %1778 = vst [vmem:[#allocation7 + $0x1a0] sm:$0xf] %v1522
    %1779 = vst [vmem:[#allocation7 + $0x1a4] sm:$0xf] %v1523
    %1780 = vst [vmem:[#allocation7 + $0x1a8] sm:$0xf] %v1524
    %1781 = vst [vmem:[#allocation7 + $0x1ac] sm:$0xf] %v1525
    %1782 = vst [vmem:[#allocation7 + $0x1b0] sm:$0xf] %v1526
    %1783 = vst [vmem:[#allocation7 + $0x1b4] sm:$0xf] %v1527
    %1784 = vst [vmem:[#allocation7 + $0x1b8] sm:$0xf] %v1528
    %1785 = vst [vmem:[#allocation7 + $0x1bc] sm:$0xf] %v1529
    %1786 = vst [vmem:[#allocation7 + $0x1c0] sm:$0xf] %v1530
    %1787 = vst [vmem:[#allocation7 + $0x1c4] sm:$0xf] %v1531
    %1788 = vst [vmem:[#allocation7 + $0x1c8] sm:$0xf] %v1532
    %1789 = vst [vmem:[#allocation7 + $0x1cc] sm:$0xf] %v1533
    %1790 = vst [vmem:[#allocation7 + $0x1d0] sm:$0xf] %v1534
    %1791 = vst [vmem:[#allocation7 + $0x1d4] sm:$0xf] %v1535
    %1792 = vst [vmem:[#allocation7 + $0x1d8] sm:$0xf] %v1536
    %1793 = vst [vmem:[#allocation7 + $0x1dc] sm:$0xf] %v1537
    %1794 = vst [vmem:[#allocation7 + $0x1e0] sm:$0xf] %v1538
    %1795 = vst [vmem:[#allocation7 + $0x1e4] sm:$0xf] %v1539
    %1796 = vst [vmem:[#allocation7 + $0x1e8] sm:$0xf] %v1540
    %1797 = vst [vmem:[#allocation7 + $0x1ec] sm:$0xf] %v1541
    %1798 = vst [vmem:[#allocation7 + $0x1f0] sm:$0xf] %v1542
    %1799 = vst [vmem:[#allocation7 + $0x1f4] sm:$0xf] %v1543
    %1800 = vst [vmem:[#allocation7 + $0x1f8] sm:$0xf] %v1544
    %1801 = vst [vmem:[#allocation7 + $0x1fc] sm:$0xf] %v1545
    // Predicated region
    $region18: #{tpu_custom_call.1} parent=1 // pred_check
      _
    $region19: #{tpu_custom_call.1} parent=1 // pred_check_branch
      %1803 = sbr.rel (0) target = $region21
    $region20: #{tpu_custom_call.1} parent=1 // pred_region
      %s1805 = ssub.s32 8192, 8192
      %1806 = vsyncadd [#allocation4], %s1805
      %s1807 = sshll.u32 [#allocation7], 4
      %s1808 = int_to_ptr.vmem [resolvable:$true] %s1807
      %1813 = dma.vmem_to_hbm [thread:$0]  %s1808, 8192, %s2, [#allocation4], 64, 64, 4
    $region21: #{tpu_custom_call.1} parent=1 // pred_fallthru
      _
    // Predicated region
    $region22: #{tpu_custom_call.1} parent=1 // pred_check
      _
    $region23: #{tpu_custom_call.1} parent=1 // pred_check_branch
      %1815 = sbr.rel (0) target = $region25
    $region24: #{tpu_custom_call.1} parent=1 // pred_region
      %1816 = dma.done [#allocation4], 8192
    $region25: #{tpu_custom_call.1} parent=1 // pred_fallthru
      _
    %1817 = vsyncpa [#allocation3], 1
    %1818 = vsyncpa [#allocation6], 1
    %1819 = vsyncpa [#allocation4], 1

</llo_original>
